<compile_context>
chip_gen: v7x
topology: tpu7x:2x2x1
jax: 0.10.0
libtpu: 0.0.40
codegen_flags: <defaults>
</compile_context>

<pallas_src>
import numpy as np
import jax
import jax.numpy as jnp
from jax import lax
from jax.experimental import pallas as pl
from jax.experimental.pallas import tpu as pltpu

# ---------------------------------------------------------------------------
# Static geometry of SubNetConv (in_channels=4) on 16x16 inputs.
# ---------------------------------------------------------------------------
CIN = 4
H = W = 16
KH = KW = 5
PAD = 2

CIN_P = 8                    # conv1 in-channels padded to one 8-lane group
COUT1 = 6
COUT1_P = 8                  # conv1 out-channels padded to one 8-lane group
COUT2 = 16
COUT2_P = 32                 # conv2 out-channels padded so WO2*COUT2_P == 128

HP1 = H + 2 * PAD            # 20 padded rows per image
WP1 = W + 2 * PAD            # 20 padded cols per image
HO1 = WO1 = H                # 16 conv1 output ("same")
HPL1 = WPL1 = HO1 // 2       # 8  after pool1
HO2 = WO2 = HPL1 - KH + 1    # 4  conv2 output (valid)
HPL2 = WPL2 = HO2 // 2       # 2  after pool2

EXTRA = 4                    # extra zero rows so each image block is 24 rows
RS1 = HP1 + EXTRA            # 24 input rows per image block
RS2 = RS1 // 2               # 12 pool1 rows per image block
RS3 = RS2 // 2               # 6  pool2 rows per image block

LANE_IN = WP1 * CIN_P        # 160 input lanes (w, c interleaved)
NLANE1 = WO1 * COUT1_P       # 128 conv1 matmul output lanes (dense)
NLANE2 = WO2 * COUT2_P       # 128 conv2 matmul output lanes (dense)


# ---------------------------------------------------------------------------
# Fused kernel: conv1 + ReLU + pool1 + conv2 + ReLU + pool2 in one invocation.
# ---------------------------------------------------------------------------
def _subnet_kernel(xp_ref, w1_ref, b1_ref, w2_ref, b2_ref, out_ref,
                   y1_ref, p1_ref, y2_ref):
    # xp_ref : (RS1*n, LANE_IN) bf16   row-flat padded input, images stacked
    # w1_ref : (KH, LANE_IN, 128) bf16 per-row-shift Toeplitz conv1 weights
    # b1_ref : (1, 128) f32
    # w2_ref : (KH, 128, 128) bf16     per-row-shift Toeplitz conv2 weights
    # b2_ref : (1, 128) f32
    # out_ref: (RS3*(n-1)+HPL2, 128) f32  lane-dense pooled conv2 output
    m1 = y1_ref.shape[0]     # conv1 output rows (both images + gap rows)
    r1 = p1_ref.shape[0]     # pool1 rows
    m2 = y2_ref.shape[0]     # conv2 output rows
    r2 = out_ref.shape[0]    # pool2 (output) rows

    # ---- conv1: KH accumulating MXU dots over row-shifted views (no im2row)
    acc1 = jnp.dot(xp_ref[pl.ds(0, m1), :], w1_ref[0],
                   preferred_element_type=jnp.float32)
    for di in range(1, KH):
        acc1 = acc1 + jnp.dot(xp_ref[pl.ds(di, m1), :], w1_ref[di],
                              preferred_element_type=jnp.float32)
    y1_ref[...] = jnp.maximum(acc1 + b1_ref[...], 0.0)           # bias + ReLU

    # ---- pool1 2x2: strided sublane max (h) + lane-roll max (w).  Pooled w
    # position j lives in lane group 2j; odd groups carry junk that the conv2
    # Toeplitz weights zero out (no lane compaction needed).
    ph1 = jnp.maximum(y1_ref[pl.ds(0, r1, stride=2), :],
                      y1_ref[pl.ds(1, r1, stride=2), :])
    p1_ref[...] = jnp.maximum(ph1, pltpu.roll(ph1, shift=NLANE1 - COUT1_P,
                                              axis=1))

    # ---- conv2: KH accumulating MXU dots over row-shifted pooled views
    acc2 = jnp.dot(p1_ref[pl.ds(0, m2), :].astype(jnp.bfloat16), w2_ref[0],
                   preferred_element_type=jnp.float32)
    for di in range(1, KH):
        acc2 = acc2 + jnp.dot(p1_ref[pl.ds(di, m2), :].astype(jnp.bfloat16),
                              w2_ref[di], preferred_element_type=jnp.float32)
    y2_ref[...] = jnp.maximum(acc2 + b2_ref[...], 0.0)

    # ---- pool2 2x2 + single lane-dense full-block store
    ph2 = jnp.maximum(y2_ref[pl.ds(0, r2, stride=2), :],
                      y2_ref[pl.ds(1, r2, stride=2), :])
    out_ref[...] = jnp.maximum(ph2, pltpu.roll(ph2, shift=NLANE2 - COUT2_P,
                                               axis=1))


# ---------------------------------------------------------------------------
# Host-side (one-time) parameter preparation: Toeplitz blocks + tiled biases.
# ---------------------------------------------------------------------------
def _build_w1_blocks(w1):
    # (COUT1, CIN, KH, KW) -> (KH, LANE_IN, NLANE1); row = w_in*8+ci, col = w_out*8+co
    Wb = np.zeros((KH, LANE_IN, NLANE1), np.float32)
    for di in range(KH):
        for wo in range(WO1):
            for dj in range(KW):
                wi = wo + dj
                Wb[di, wi * CIN_P:wi * CIN_P + CIN,
                   wo * COUT1_P:wo * COUT1_P + COUT1] = w1[:, :, di, dj].T
    return Wb


def _build_w2_blocks(w2):
    # (COUT2, COUT1, KH, KW) -> (KH, NLANE1, NLANE2).  Only even 8-lane input
    # groups (pooled w positions) carry nonzero rows; odd (junk) groups are 0.
    Wb = np.zeros((KH, NLANE1, NLANE2), np.float32)
    for di in range(KH):
        for wo in range(WO2):
            for dw in range(KW):
                g = 2 * (wo + dw)
                Wb[di, g * COUT1_P:g * COUT1_P + COUT1,
                   wo * COUT2_P:wo * COUT2_P + COUT2] = w2[:, :, di, dw].T
    return Wb


def prepare_params(params):
    """Run once, outside the jitted forward (steady-state calls only DMA)."""
    w1 = np.asarray(params["w1"], np.float32)
    b1 = np.asarray(params["b1"], np.float32)
    w2 = np.asarray(params["w2"], np.float32)
    b2 = np.asarray(params["b2"], np.float32)
    bias1 = np.tile(np.pad(b1, (0, COUT1_P - COUT1)), WO1)[None, :]   # (1,128)
    bias2 = np.tile(np.pad(b2, (0, COUT2_P - COUT2)), WO2)[None, :]   # (1,128)
    return {
        "W1": jnp.asarray(_build_w1_blocks(w1), jnp.bfloat16),
        "B1": jnp.asarray(bias1, jnp.float32),
        "W2": jnp.asarray(_build_w2_blocks(w2), jnp.bfloat16),
        "B2": jnp.asarray(bias2, jnp.float32),
    }


# ---------------------------------------------------------------------------
# Forward
# ---------------------------------------------------------------------------
@jax.jit
def subnet_conv_forward(x_nchw, prepped):
    n = x_nchw.shape[0]
    m1 = RS1 * (n - 1) + HO1       # conv1 rows (images stacked in M)
    r1 = m1 // 2                   # pool1 rows
    m2 = RS2 * (n - 1) + HO2       # conv2 rows
    r2 = m2 // 2                   # pool2 rows (= kernel output rows)

    # Input prep: NCHW -> padded NHWC -> row-flat bf16 (RS1*n, 160).
    xr = jnp.transpose(x_nchw, (0, 2, 3, 1))
    xr = jnp.pad(xr, ((0, 0), (PAD, PAD + EXTRA), (PAD, PAD), (0, CIN_P - CIN)))
    xp = xr.reshape(n * RS1, LANE_IN).astype(jnp.bfloat16)

    out = pl.pallas_call(
        _subnet_kernel,
        out_shape=jax.ShapeDtypeStruct((r2, NLANE2), jnp.float32),
        grid=(1,),
        in_specs=[
            pl.BlockSpec((n * RS1, LANE_IN), lambda i: (0, 0)),
            pl.BlockSpec((KH, LANE_IN, NLANE1), lambda i: (0, 0, 0)),
            pl.BlockSpec((1, NLANE1), lambda i: (0, 0)),
            pl.BlockSpec((KH, NLANE1, NLANE2), lambda i: (0, 0, 0)),
            pl.BlockSpec((1, NLANE2), lambda i: (0, 0)),
        ],
        out_specs=pl.BlockSpec((r2, NLANE2), lambda i: (0, 0)),
        scratch_shapes=[
            pltpu.VMEM((m1, NLANE1), jnp.float32),   # y1 (conv1 + ReLU)
            pltpu.VMEM((r1, NLANE1), jnp.float32),   # p1 (pool1)
            pltpu.VMEM((m2, NLANE2), jnp.float32),   # y2 (conv2 + ReLU)
        ],
        compiler_params=pltpu.CompilerParams(
            dimension_semantics=("arbitrary",)),
    )(xp, prepped["W1"], prepped["B1"], prepped["W2"], prepped["B2"])

    # NCHW flatten of the 64 valid values per image: free XLA layout plumbing.
    # Valid rows per image i are [RS3*i, RS3*i+HPL2); valid lane groups 0 and 2.
    o = out.reshape(r2, WO2, COUT2_P)
    y = jnp.stack([o[RS3 * i: RS3 * i + HPL2, ::2, :COUT2] for i in range(n)])
    return jnp.transpose(y, (0, 3, 1, 2)).reshape(n, COUT2 * HPL2 * WPL2)


# ---------------------------------------------------------------------------
# Pure-JAX reference (correctness check)
# ---------------------------------------------------------------------------
def reference_forward(x_nchw, params):
    dn = ("NCHW", "OIHW", "NCHW")
    y = lax.conv_general_dilated(x_nchw, params["w1"], (1, 1),
                                 ((PAD, PAD), (PAD, PAD)), dimension_numbers=dn)
    y = jnp.maximum(y + params["b1"][None, :, None, None], 0.0)
    y = lax.reduce_window(y, -jnp.inf, lax.max, (1, 1, 2, 2), (1, 1, 2, 2), "VALID")
    y = lax.conv_general_dilated(y, params["w2"], (1, 1), "VALID",
                                 dimension_numbers=dn)
    y = jnp.maximum(y + params["b2"][None, :, None, None], 0.0)
    y = lax.reduce_window(y, -jnp.inf, lax.max, (1, 1, 2, 2), (1, 1, 2, 2), "VALID")
    return y.reshape(y.shape[0], -1)


if __name__ == "__main__":
    N = 2
    key = jax.random.PRNGKey(0)
    k_x, k_w1, k_b1, k_w2, k_b2 = jax.random.split(key, 5)

    x = jax.random.normal(k_x, (N, CIN, H, W), jnp.float32)
    params = {
        "w1": 0.1 * jax.random.normal(k_w1, (COUT1, CIN, KH, KW), jnp.float32),
        "b1": 0.1 * jax.random.normal(k_b1, (COUT1,), jnp.float32),
        "w2": 0.1 * jax.random.normal(k_w2, (COUT2, COUT1, KH, KW), jnp.float32),
        "b2": 0.1 * jax.random.normal(k_b2, (COUT2,), jnp.float32),
    }

    prepped = prepare_params(params)   # host-side, once; not in the fwd path
    out = jax.block_until_ready(subnet_conv_forward(x, prepped))
    ref = jax.block_until_ready(reference_forward(x, params))

    assert out.shape == (N, COUT2 * HPL2 * WPL2), out.shape
    # Tolerance accounts for bf16 MXU operands (f32 accumulation).
    np.testing.assert_allclose(np.asarray(out), np.asarray(ref),
                               rtol=3e-2, atol=3e-2)

    # TODO(synk): parameter_rrefs / torch.distributed RPC plumbing has no
    # Pallas equivalent and is not part of the forward compute.
    print("KERNEL_OK")
</pallas_src>

<mosaic_0001>
module attributes {stable_mosaic.version = 11 : i64} {
  func.func @_subnet_kernel(%arg0: i32, %arg1: memref<48x160xbf16, #tpu.memory_space<vmem>>, %arg2: memref<5x160x128xbf16, #tpu.memory_space<vmem>>, %arg3: memref<1x128xf32, #tpu.memory_space<vmem>>, %arg4: memref<5x128x128xbf16, #tpu.memory_space<vmem>>, %arg5: memref<1x128xf32, #tpu.memory_space<vmem>>, %arg6: memref<8x128xf32, #tpu.memory_space<vmem>>, %arg7: memref<40x128xf32, #tpu.memory_space<vmem>>, %arg8: memref<20x128xf32, #tpu.memory_space<vmem>>, %arg9: memref<16x128xf32, #tpu.memory_space<vmem>>) attributes {dimension_semantics = [#tpu.dimension_semantics<arbitrary>], iteration_bounds = array<i64: 1>, scalar_prefetch = 0 : i64, scratch_operands = 3 : i64, tpu.core_type = #tpu.core_type<tc>, window_params = [{pipeline_mode = #tpu.pipeline_mode<synchronous>, transform_indices = @transform_0, window_bounds = array<i64: 48, 160>}, {pipeline_mode = #tpu.pipeline_mode<synchronous>, transform_indices = @transform_1, window_bounds = array<i64: 5, 160, 128>}, {pipeline_mode = #tpu.pipeline_mode<synchronous>, transform_indices = @transform_2, window_bounds = array<i64: 1, 128>}, {pipeline_mode = #tpu.pipeline_mode<synchronous>, transform_indices = @transform_3, window_bounds = array<i64: 5, 128, 128>}, {pipeline_mode = #tpu.pipeline_mode<synchronous>, transform_indices = @transform_4, window_bounds = array<i64: 1, 128>}, {pipeline_mode = #tpu.pipeline_mode<synchronous>, transform_indices = @transform_5, window_bounds = array<i64: 8, 128>}]} {
    %c0 = arith.constant 0 : index
    %c0_0 = arith.constant 0 : index
    %0 = vector.load %arg1[%c0, %c0_0] : memref<48x160xbf16, #tpu.memory_space<vmem>>, vector<40x160xbf16>
    %c0_1 = arith.constant 0 : index
    %c0_2 = arith.constant 0 : index
    %c0_3 = arith.constant 0 : index
    %1 = vector.load %arg2[%c0_1, %c0_2, %c0_3] : memref<5x160x128xbf16, #tpu.memory_space<vmem>>, vector<1x160x128xbf16>
    %2 = vector.shape_cast %1 : vector<1x160x128xbf16> to vector<160x128xbf16>
    %cst = arith.constant dense<0.000000e+00> : vector<40x128xf32>
    %3 = tpu.matmul %0, %2, %cst {dimension_numbers = #tpu.dot_dimension_numbers<[1], [0], [0], [1], [0, 0, 1, 1], [], []>} : vector<40x160xbf16>, vector<160x128xbf16>, vector<40x128xf32> -> vector<40x128xf32>
    %c1 = arith.constant 1 : index
    %c0_4 = arith.constant 0 : index
    %4 = vector.load %arg1[%c1, %c0_4] : memref<48x160xbf16, #tpu.memory_space<vmem>>, vector<40x160xbf16>
    %c1_5 = arith.constant 1 : index
    %c0_6 = arith.constant 0 : index
    %c0_7 = arith.constant 0 : index
    %5 = vector.load %arg2[%c1_5, %c0_6, %c0_7] : memref<5x160x128xbf16, #tpu.memory_space<vmem>>, vector<1x160x128xbf16>
    %6 = vector.shape_cast %5 : vector<1x160x128xbf16> to vector<160x128xbf16>
    %cst_8 = arith.constant dense<0.000000e+00> : vector<40x128xf32>
    %7 = tpu.matmul %4, %6, %cst_8 {dimension_numbers = #tpu.dot_dimension_numbers<[1], [0], [0], [1], [0, 0, 1, 1], [], []>} : vector<40x160xbf16>, vector<160x128xbf16>, vector<40x128xf32> -> vector<40x128xf32>
    %8 = arith.addf %3, %7 : vector<40x128xf32>
    %c2 = arith.constant 2 : index
    %c0_9 = arith.constant 0 : index
    %9 = vector.load %arg1[%c2, %c0_9] : memref<48x160xbf16, #tpu.memory_space<vmem>>, vector<40x160xbf16>
    %c2_10 = arith.constant 2 : index
    %c0_11 = arith.constant 0 : index
    %c0_12 = arith.constant 0 : index
    %10 = vector.load %arg2[%c2_10, %c0_11, %c0_12] : memref<5x160x128xbf16, #tpu.memory_space<vmem>>, vector<1x160x128xbf16>
    %11 = vector.shape_cast %10 : vector<1x160x128xbf16> to vector<160x128xbf16>
    %cst_13 = arith.constant dense<0.000000e+00> : vector<40x128xf32>
    %12 = tpu.matmul %9, %11, %cst_13 {dimension_numbers = #tpu.dot_dimension_numbers<[1], [0], [0], [1], [0, 0, 1, 1], [], []>} : vector<40x160xbf16>, vector<160x128xbf16>, vector<40x128xf32> -> vector<40x128xf32>
    %13 = arith.addf %8, %12 : vector<40x128xf32>
    %c3 = arith.constant 3 : index
    %c0_14 = arith.constant 0 : index
    %14 = vector.load %arg1[%c3, %c0_14] : memref<48x160xbf16, #tpu.memory_space<vmem>>, vector<40x160xbf16>
    %c3_15 = arith.constant 3 : index
    %c0_16 = arith.constant 0 : index
    %c0_17 = arith.constant 0 : index
    %15 = vector.load %arg2[%c3_15, %c0_16, %c0_17] : memref<5x160x128xbf16, #tpu.memory_space<vmem>>, vector<1x160x128xbf16>
    %16 = vector.shape_cast %15 : vector<1x160x128xbf16> to vector<160x128xbf16>
    %cst_18 = arith.constant dense<0.000000e+00> : vector<40x128xf32>
    %17 = tpu.matmul %14, %16, %cst_18 {dimension_numbers = #tpu.dot_dimension_numbers<[1], [0], [0], [1], [0, 0, 1, 1], [], []>} : vector<40x160xbf16>, vector<160x128xbf16>, vector<40x128xf32> -> vector<40x128xf32>
    %18 = arith.addf %13, %17 : vector<40x128xf32>
    %c4 = arith.constant 4 : index
    %c0_19 = arith.constant 0 : index
    %19 = vector.load %arg1[%c4, %c0_19] : memref<48x160xbf16, #tpu.memory_space<vmem>>, vector<40x160xbf16>
    %c4_20 = arith.constant 4 : index
    %c0_21 = arith.constant 0 : index
    %c0_22 = arith.constant 0 : index
    %20 = vector.load %arg2[%c4_20, %c0_21, %c0_22] : memref<5x160x128xbf16, #tpu.memory_space<vmem>>, vector<1x160x128xbf16>
    %21 = vector.shape_cast %20 : vector<1x160x128xbf16> to vector<160x128xbf16>
    %cst_23 = arith.constant dense<0.000000e+00> : vector<40x128xf32>
    %22 = tpu.matmul %19, %21, %cst_23 {dimension_numbers = #tpu.dot_dimension_numbers<[1], [0], [0], [1], [0, 0, 1, 1], [], []>} : vector<40x160xbf16>, vector<160x128xbf16>, vector<40x128xf32> -> vector<40x128xf32>
    %23 = arith.addf %18, %22 : vector<40x128xf32>
    %c0_24 = arith.constant 0 : index
    %c0_25 = arith.constant 0 : index
    %24 = vector.load %arg3[%c0_24, %c0_25] : memref<1x128xf32, #tpu.memory_space<vmem>>, vector<1x128xf32>
    %25 = vector.broadcast %24 : vector<1x128xf32> to vector<40x128xf32>
    %26 = arith.addf %23, %25 : vector<40x128xf32>
    %cst_26 = arith.constant 0.000000e+00 : f32
    %27 = vector.broadcast %cst_26 : f32 to vector<40x128xf32>
    %28 = arith.maximumf %26, %27 : vector<40x128xf32>
    %c0_27 = arith.constant 0 : index
    %c0_28 = arith.constant 0 : index
    %29 = vector.load %arg7[%c0_27, %c0_28] : memref<40x128xf32, #tpu.memory_space<vmem>>, vector<40x128xf32>
    tpu.vector_store %arg7[%c0_27, %c0_28], %28 {strides = array<i32>} : memref<40x128xf32, #tpu.memory_space<vmem>>, vector<40x128xf32>,
    %c0_29 = arith.constant 0 : index
    %c0_30 = arith.constant 0 : index
    %30 = tpu.strided_load %arg7[%c0_29, %c0_30] {strides = array<i32: 2, 1>} : memref<40x128xf32, #tpu.memory_space<vmem>>, vector<20x128xf32>
    %c1_31 = arith.constant 1 : index
    %c0_32 = arith.constant 0 : index
    %31 = tpu.strided_load %arg7[%c1_31, %c0_32] {strides = array<i32: 2, 1>} : memref<40x128xf32, #tpu.memory_space<vmem>>, vector<20x128xf32>
    %32 = arith.maximumf %30, %31 : vector<20x128xf32>
    %c120_i32 = arith.constant 120 : i32
    %33 = tpu.dynamic_rotate %32 by %c120_i32 dim 1 : vector<20x128xf32>, i32 -> vector<20x128xf32>
    %34 = arith.maximumf %32, %33 : vector<20x128xf32>
    %c0_33 = arith.constant 0 : index
    %c0_34 = arith.constant 0 : index
    %35 = vector.load %arg8[%c0_33, %c0_34] : memref<20x128xf32, #tpu.memory_space<vmem>>, vector<20x128xf32>
    tpu.vector_store %arg8[%c0_33, %c0_34], %34 {strides = array<i32>} : memref<20x128xf32, #tpu.memory_space<vmem>>, vector<20x128xf32>,
    %c0_35 = arith.constant 0 : index
    %c0_36 = arith.constant 0 : index
    %36 = vector.load %arg8[%c0_35, %c0_36] : memref<20x128xf32, #tpu.memory_space<vmem>>, vector<16x128xf32>
    %37 = arith.truncf %36 : vector<16x128xf32> to vector<16x128xbf16>
    %c0_37 = arith.constant 0 : index
    %c0_38 = arith.constant 0 : index
    %c0_39 = arith.constant 0 : index
    %38 = vector.load %arg4[%c0_37, %c0_38, %c0_39] : memref<5x128x128xbf16, #tpu.memory_space<vmem>>, vector<1x128x128xbf16>
    %39 = vector.shape_cast %38 : vector<1x128x128xbf16> to vector<128x128xbf16>
    %cst_40 = arith.constant dense<0.000000e+00> : vector<16x128xf32>
    %40 = tpu.matmul %37, %39, %cst_40 {dimension_numbers = #tpu.dot_dimension_numbers<[1], [0], [0], [1], [0, 0, 1, 1], [], []>} : vector<16x128xbf16>, vector<128x128xbf16>, vector<16x128xf32> -> vector<16x128xf32>
    %c1_41 = arith.constant 1 : index
    %c0_42 = arith.constant 0 : index
    %41 = vector.load %arg8[%c1_41, %c0_42] : memref<20x128xf32, #tpu.memory_space<vmem>>, vector<16x128xf32>
    %42 = arith.truncf %41 : vector<16x128xf32> to vector<16x128xbf16>
    %c1_43 = arith.constant 1 : index
    %c0_44 = arith.constant 0 : index
    %c0_45 = arith.constant 0 : index
    %43 = vector.load %arg4[%c1_43, %c0_44, %c0_45] : memref<5x128x128xbf16, #tpu.memory_space<vmem>>, vector<1x128x128xbf16>
    %44 = vector.shape_cast %43 : vector<1x128x128xbf16> to vector<128x128xbf16>
    %cst_46 = arith.constant dense<0.000000e+00> : vector<16x128xf32>
    %45 = tpu.matmul %42, %44, %cst_46 {dimension_numbers = #tpu.dot_dimension_numbers<[1], [0], [0], [1], [0, 0, 1, 1], [], []>} : vector<16x128xbf16>, vector<128x128xbf16>, vector<16x128xf32> -> vector<16x128xf32>
    %46 = arith.addf %40, %45 : vector<16x128xf32>
    %c2_47 = arith.constant 2 : index
    %c0_48 = arith.constant 0 : index
    %47 = vector.load %arg8[%c2_47, %c0_48] : memref<20x128xf32, #tpu.memory_space<vmem>>, vector<16x128xf32>
    %48 = arith.truncf %47 : vector<16x128xf32> to vector<16x128xbf16>
    %c2_49 = arith.constant 2 : index
    %c0_50 = arith.constant 0 : index
    %c0_51 = arith.constant 0 : index
    %49 = vector.load %arg4[%c2_49, %c0_50, %c0_51] : memref<5x128x128xbf16, #tpu.memory_space<vmem>>, vector<1x128x128xbf16>
    %50 = vector.shape_cast %49 : vector<1x128x128xbf16> to vector<128x128xbf16>
    %cst_52 = arith.constant dense<0.000000e+00> : vector<16x128xf32>
    %51 = tpu.matmul %48, %50, %cst_52 {dimension_numbers = #tpu.dot_dimension_numbers<[1], [0], [0], [1], [0, 0, 1, 1], [], []>} : vector<16x128xbf16>, vector<128x128xbf16>, vector<16x128xf32> -> vector<16x128xf32>
    %52 = arith.addf %46, %51 : vector<16x128xf32>
    %c3_53 = arith.constant 3 : index
    %c0_54 = arith.constant 0 : index
    %53 = vector.load %arg8[%c3_53, %c0_54] : memref<20x128xf32, #tpu.memory_space<vmem>>, vector<16x128xf32>
    %54 = arith.truncf %53 : vector<16x128xf32> to vector<16x128xbf16>
    %c3_55 = arith.constant 3 : index
    %c0_56 = arith.constant 0 : index
    %c0_57 = arith.constant 0 : index
    %55 = vector.load %arg4[%c3_55, %c0_56, %c0_57] : memref<5x128x128xbf16, #tpu.memory_space<vmem>>, vector<1x128x128xbf16>
    %56 = vector.shape_cast %55 : vector<1x128x128xbf16> to vector<128x128xbf16>
    %cst_58 = arith.constant dense<0.000000e+00> : vector<16x128xf32>
    %57 = tpu.matmul %54, %56, %cst_58 {dimension_numbers = #tpu.dot_dimension_numbers<[1], [0], [0], [1], [0, 0, 1, 1], [], []>} : vector<16x128xbf16>, vector<128x128xbf16>, vector<16x128xf32> -> vector<16x128xf32>
    %58 = arith.addf %52, %57 : vector<16x128xf32>
    %c4_59 = arith.constant 4 : index
    %c0_60 = arith.constant 0 : index
    %59 = vector.load %arg8[%c4_59, %c0_60] : memref<20x128xf32, #tpu.memory_space<vmem>>, vector<16x128xf32>
    %60 = arith.truncf %59 : vector<16x128xf32> to vector<16x128xbf16>
    %c4_61 = arith.constant 4 : index
    %c0_62 = arith.constant 0 : index
    %c0_63 = arith.constant 0 : index
    %61 = vector.load %arg4[%c4_61, %c0_62, %c0_63] : memref<5x128x128xbf16, #tpu.memory_space<vmem>>, vector<1x128x128xbf16>
    %62 = vector.shape_cast %61 : vector<1x128x128xbf16> to vector<128x128xbf16>
    %cst_64 = arith.constant dense<0.000000e+00> : vector<16x128xf32>
    %63 = tpu.matmul %60, %62, %cst_64 {dimension_numbers = #tpu.dot_dimension_numbers<[1], [0], [0], [1], [0, 0, 1, 1], [], []>} : vector<16x128xbf16>, vector<128x128xbf16>, vector<16x128xf32> -> vector<16x128xf32>
    %64 = arith.addf %58, %63 : vector<16x128xf32>
    %c0_65 = arith.constant 0 : index
    %c0_66 = arith.constant 0 : index
    %65 = vector.load %arg5[%c0_65, %c0_66] : memref<1x128xf32, #tpu.memory_space<vmem>>, vector<1x128xf32>
    %66 = vector.broadcast %65 : vector<1x128xf32> to vector<16x128xf32>
    %67 = arith.addf %64, %66 : vector<16x128xf32>
    %cst_67 = arith.constant 0.000000e+00 : f32
    %68 = vector.broadcast %cst_67 : f32 to vector<16x128xf32>
    %69 = arith.maximumf %67, %68 : vector<16x128xf32>
    %c0_68 = arith.constant 0 : index
    %c0_69 = arith.constant 0 : index
    %70 = vector.load %arg9[%c0_68, %c0_69] : memref<16x128xf32, #tpu.memory_space<vmem>>, vector<16x128xf32>
    tpu.vector_store %arg9[%c0_68, %c0_69], %69 {strides = array<i32>} : memref<16x128xf32, #tpu.memory_space<vmem>>, vector<16x128xf32>,
    %c0_70 = arith.constant 0 : index
    %c0_71 = arith.constant 0 : index
    %71 = tpu.strided_load %arg9[%c0_70, %c0_71] {strides = array<i32: 2, 1>} : memref<16x128xf32, #tpu.memory_space<vmem>>, vector<8x128xf32>
    %c1_72 = arith.constant 1 : index
    %c0_73 = arith.constant 0 : index
    %72 = tpu.strided_load %arg9[%c1_72, %c0_73] {strides = array<i32: 2, 1>} : memref<16x128xf32, #tpu.memory_space<vmem>>, vector<8x128xf32>
    %73 = arith.maximumf %71, %72 : vector<8x128xf32>
    %c96_i32 = arith.constant 96 : i32
    %74 = tpu.dynamic_rotate %73 by %c96_i32 dim 1 : vector<8x128xf32>, i32 -> vector<8x128xf32>
    %75 = arith.maximumf %73, %74 : vector<8x128xf32>
    %c0_74 = arith.constant 0 : index
    %c0_75 = arith.constant 0 : index
    %76 = vector.load %arg6[%c0_74, %c0_75] : memref<8x128xf32, #tpu.memory_space<vmem>>, vector<8x128xf32>
    tpu.vector_store %arg6[%c0_74, %c0_75], %75 {strides = array<i32>} : memref<8x128xf32, #tpu.memory_space<vmem>>, vector<8x128xf32>,
    return
  }
  func.func @transform_0(%arg0: i32) -> (i32, i32) {
    %c0_i32 = arith.constant 0 : i32
    %c0_i32_0 = arith.constant 0 : i32
    %c0_i32_1 = arith.constant 0 : i32
    return %c0_i32, %c0_i32_0 : i32, i32
  }
  func.func @transform_1(%arg0: i32) -> (i32, i32, i32) {
    %c0_i32 = arith.constant 0 : i32
    %c0_i32_0 = arith.constant 0 : i32
    %c0_i32_1 = arith.constant 0 : i32
    %c0_i32_2 = arith.constant 0 : i32
    return %c0_i32, %c0_i32_0, %c0_i32_1 : i32, i32, i32
  }
  func.func @transform_2(%arg0: i32) -> (i32, i32) {
    %c0_i32 = arith.constant 0 : i32
    %c0_i32_0 = arith.constant 0 : i32
    %c0_i32_1 = arith.constant 0 : i32
    return %c0_i32, %c0_i32_0 : i32, i32
  }
  func.func @transform_3(%arg0: i32) -> (i32, i32, i32) {
    %c0_i32 = arith.constant 0 : i32
    %c0_i32_0 = arith.constant 0 : i32
    %c0_i32_1 = arith.constant 0 : i32
    %c0_i32_2 = arith.constant 0 : i32
    return %c0_i32, %c0_i32_0, %c0_i32_1 : i32, i32, i32
  }
  func.func @transform_4(%arg0: i32) -> (i32, i32) {
    %c0_i32 = arith.constant 0 : i32
    %c0_i32_0 = arith.constant 0 : i32
    %c0_i32_1 = arith.constant 0 : i32
    return %c0_i32, %c0_i32_0 : i32, i32
  }
  func.func @transform_5(%arg0: i32) -> (i32, i32) {
    %c0_i32 = arith.constant 0 : i32
    %c0_i32_0 = arith.constant 0 : i32
    %c0_i32_1 = arith.constant 0 : i32
    return %c0_i32, %c0_i32_0 : i32, i32
  }
}

</mosaic_0001>

<llo_original>
// kernel: subnet_conv_forward.1
$region0: #{subnet_conv_forward.1}
  #allocation0 [shape = 'u32[]', space=smem, size = 0x4, offset = 0x4, fixed_abs, tag = 'smem constant byte address 0x4 - core index']
  #allocation1 [shape = 'u32[144,128]{1,0:T(1,128)}', space=vmem, size = 0x12000, scoped, tag = 'internal scratch']
  #allocation2 [shape = 'f32[40,128]{1,0:T(8,128)}', space=vmem, size = 0x5000, scoped, tag = 'scratch operand']
  #allocation3 [shape = 'f32[20,128]{1,0:T(8,128)}', space=vmem, size = 0x3000, scoped, tag = 'scratch operand']
  #allocation4 [shape = 'f32[16,128]{1,0:T(8,128)}', space=vmem, size = 0x2000, scoped, tag = 'scratch operand']
  %s0 = inlined_call_operand.vmem [shape: bf16[48,160], index: 0, kind: input, shape index: {}]
  %s1 = inlined_call_operand.vmem [shape: bf16[5,160,128], index: 1, kind: input, shape index: {}]
  %s2 = inlined_call_operand.vmem [shape: f32[1,128], index: 2, kind: input, shape index: {}]
  %s3 = inlined_call_operand.vmem [shape: bf16[5,128,128], index: 3, kind: input, shape index: {}]
  %s4 = inlined_call_operand.vmem [shape: f32[1,128], index: 4, kind: input, shape index: {}]
  %s5 = inlined_call_operand.vmem [shape: f32[8,128], index: 5, kind: output, shape index: {}]
  %s6 = sld [smem:[#allocation0]]
  $region30: #{subnet_conv_forward.1} parent=0
    _
  %s8 = ssub.s32 1, %s6
  %s9 = scalar_select 0, %s8, %s6
  // Predicated region
  $region2: #{subnet_conv_forward.1} parent=0 // pred_check
    _
  $region3: #{subnet_conv_forward.1} parent=0 // pred_check_branch
    %11 = sbr.rel (0) target = $region5
  $region4: #{subnet_conv_forward.1} parent=0 // pred_region
    _
  $region5: #{subnet_conv_forward.1} parent=0 // pred_fallthru
    _
  // Predicated region
  $region6: #{subnet_conv_forward.1} parent=0 // pred_check
    _
  $region7: #{subnet_conv_forward.1} parent=0 // pred_check_branch
    %13 = sbr.rel (0) target = $region9
  $region8: #{subnet_conv_forward.1} parent=0 // pred_region
    _
  $region9: #{subnet_conv_forward.1} parent=0 // pred_fallthru
    _
  // Predicated region
  $region10: #{subnet_conv_forward.1} parent=0 // pred_check
    _
  $region11: #{subnet_conv_forward.1} parent=0 // pred_check_branch
    %15 = sbr.rel (0) target = $region13
  $region12: #{subnet_conv_forward.1} parent=0 // pred_region
    _
  $region13: #{subnet_conv_forward.1} parent=0 // pred_fallthru
    _
  // Predicated region
  $region14: #{subnet_conv_forward.1} parent=0 // pred_check
    _
  $region15: #{subnet_conv_forward.1} parent=0 // pred_check_branch
    %17 = sbr.rel (0) target = $region17
  $region16: #{subnet_conv_forward.1} parent=0 // pred_region
    _
  $region17: #{subnet_conv_forward.1} parent=0 // pred_fallthru
    _
  // Predicated region
  $region18: #{subnet_conv_forward.1} parent=0 // pred_check
    _
  $region19: #{subnet_conv_forward.1} parent=0 // pred_check_branch
    %19 = sbr.rel (0) target = $region21
  $region20: #{subnet_conv_forward.1} parent=0 // pred_region
    _
  $region21: #{subnet_conv_forward.1} parent=0 // pred_fallthru
    _
  %v21 = vld [vmem:[%s0] sm:$0xff]
  %v22 = vld [vmem:[%s0 + $0x8] sm:$0xff]
  %v23 = vld [vmem:[%s0 + $0x10] sm:$0xff]
  %v24 = vld [vmem:[%s0 + $0x18] sm:$0xff]
  %v25 = vld [vmem:[%s0 + $0x20] sm:$0xff]
  %v26 = vld [vmem:[%s1] sm:$0xf]
  %v27 = vld [vmem:[%s1 + $0x4] sm:$0xf]
  %v28 = vld [vmem:[%s1 + $0x8] sm:$0xf]
  %v29 = vld [vmem:[%s1 + $0xc] sm:$0xf]
  %v30 = vld [vmem:[%s1 + $0x10] sm:$0xf]
  %v31 = vld [vmem:[%s1 + $0x14] sm:$0xf]
  %v32 = vld [vmem:[%s1 + $0x18] sm:$0xf]
  %v33 = vld [vmem:[%s1 + $0x1c] sm:$0xf]
  %v34 = vld [vmem:[%s1 + $0x20] sm:$0xf]
  %v35 = vld [vmem:[%s1 + $0x24] sm:$0xf]
  %v36 = vld [vmem:[%s1 + $0x28] sm:$0xf]
  %v37 = vld [vmem:[%s1 + $0x2c] sm:$0xf]
  %v38 = vld [vmem:[%s1 + $0x30] sm:$0xf]
  %v39 = vld [vmem:[%s1 + $0x34] sm:$0xf]
  %v40 = vld [vmem:[%s1 + $0x38] sm:$0xf]
  %v41 = vld [vmem:[%s1 + $0x3c] sm:$0xf]
  %v42 = vld [vmem:[%s1 + $0x40] sm:$0xf]
  %v43 = vld [vmem:[%s1 + $0x44] sm:$0xf]
  %v44 = vld [vmem:[%s1 + $0x48] sm:$0xf]
  %v45 = vld [vmem:[%s1 + $0x4c] sm:$0xf]
  %v46 = vld [vmem:[%s0 + $0x28] sm:$0x11]
  %s47 = scalar_lea.vmem %s1, 80
  %v48 = vld [vmem:[%s47] sm:$0xf]
  %v49 = vld [vmem:[%s47 + $0x4] sm:$0xf]
  %v50 = vld [vmem:[%s47 + $0x8] sm:$0xf]
  %v51 = vld [vmem:[%s47 + $0xc] sm:$0xf]
  %v52 = vld [vmem:[%s47 + $0x10] sm:$0xf]
  %v53 = vld [vmem:[%s47 + $0x14] sm:$0xf]
  %v54 = vld [vmem:[%s47 + $0x18] sm:$0xf]
  %v55 = vld [vmem:[%s47 + $0x1c] sm:$0xf]
  %v56 = vld [vmem:[%s47 + $0x20] sm:$0xf]
  %v57 = vld [vmem:[%s47 + $0x24] sm:$0xf]
  %v58 = vld [vmem:[%s47 + $0x28] sm:$0xf]
  %v59 = vld [vmem:[%s47 + $0x2c] sm:$0xf]
  %v60 = vld [vmem:[%s47 + $0x30] sm:$0xf]
  %v61 = vld [vmem:[%s47 + $0x34] sm:$0xf]
  %v62 = vld [vmem:[%s47 + $0x38] sm:$0xf]
  %v63 = vld [vmem:[%s47 + $0x3c] sm:$0xf]
  %v64 = vld [vmem:[%s47 + $0x40] sm:$0xf]
  %v65 = vld [vmem:[%s47 + $0x44] sm:$0xf]
  %v66 = vld [vmem:[%s47 + $0x48] sm:$0xf]
  %v67 = vld [vmem:[%s47 + $0x4c] sm:$0xf]
  %v74 = vunpack.c.l.b16 %v21
  %v75 = vunpack.c.h.b16 %v21
  %v76 = vunpack.c.l.b16 %v22
  %v77 = vunpack.c.h.b16 %v22
  %v78 = vunpack.c.l.b16 %v23
  %v79 = vunpack.c.h.b16 %v23
  %v80 = vunpack.c.l.b16 %v24
  %v81 = vunpack.c.h.b16 %v24
  %v82 = vunpack.c.l.b16 %v25
  %v83 = vunpack.c.h.b16 %v25
  %v84 = vunpack.c.l.b16 %v46
  %v85 = vunpack.c.h.b16 %v46
  %v86 = vpack.c.b16 %v76, %v74
  %v87 = vpack.c.b16 %v77, %v75
  %v88 = vpack.c.b16 %v80, %v78
  %v89 = vpack.c.b16 %v81, %v79
  %v90 = vpack.c.b16 %v84, %v82
  %v91 = vpack.c.b16 %v85, %v83
  %vm92 = vsmask.f32 7424
  %v94 = vshrl.u32 %v86, 16
  %v96 = vshll.u32 %v86, 16
  %v98 = vrot.slane %v96, 1
  %v99 = vor.u32 %v94, %v98
  %v101 = vshll.u32 %v88, 16
  %v103 = vrot.slane %v101, 1
  %v104 = vsel %vm92, %v99, %v103
  %v106 = vshrl.u32 %v87, 16
  %v108 = vshll.u32 %v87, 16
  %v110 = vrot.slane %v108, 1
  %v111 = vor.u32 %v106, %v110
  %v113 = vshll.u32 %v89, 16
  %v115 = vrot.slane %v113, 1
  %v116 = vsel %vm92, %v111, %v115
  %v117 = vshrl.u32 %v88, 16
  %v119 = vor.u32 %v117, %v103
  %v121 = vshll.u32 %v90, 16
  %v123 = vrot.slane %v121, 1
  %v124 = vsel %vm92, %v119, %v123
  %v125 = vshrl.u32 %v89, 16
  %v127 = vor.u32 %v125, %v115
  %v129 = vshll.u32 %v91, 16
  %v131 = vrot.slane %v129, 1
  %v132 = vsel %vm92, %v127, %v131
  %v133 = vshrl.u32 %v90, 16
  %v135 = vor.u32 %v133, %v123
  %v136 = vshrl.u32 %v91, 16
  %v138 = vor.u32 %v136, %v131
  %v162 = vunpack.c.l.b16 %v48
  %v163 = vunpack.c.l.b16 %v49
  %v164 = vunpack.c.l.b16 %v50
  %v165 = vunpack.c.l.b16 %v51
  %v166 = vunpack.c.l.b16 %v52
  %v167 = vunpack.c.l.b16 %v53
  %v168 = vunpack.c.l.b16 %v54
  %v169 = vunpack.c.l.b16 %v55
  %v170 = vunpack.c.l.b16 %v56
  %v171 = vunpack.c.l.b16 %v57
  %v172 = vunpack.c.l.b16 %v58
  %v173 = vunpack.c.l.b16 %v59
  %v174 = vunpack.c.l.b16 %v60
  %v175 = vunpack.c.l.b16 %v61
  %v176 = vunpack.c.l.b16 %v62
  %v177 = vunpack.c.l.b16 %v63
  %v178 = vunpack.c.l.b16 %v64
  %v179 = vunpack.c.l.b16 %v65
  %v180 = vunpack.c.l.b16 %v66
  %v181 = vunpack.c.l.b16 %v67
  %v182 = vpack.c.b16 %v163, %v162
  %v183 = vpack.c.b16 %v165, %v164
  %v184 = vpack.c.b16 %v167, %v166
  %v185 = vpack.c.b16 %v169, %v168
  %v186 = vpack.c.b16 %v171, %v170
  %v187 = vpack.c.b16 %v173, %v172
  %v188 = vpack.c.b16 %v175, %v174
  %v189 = vpack.c.b16 %v177, %v176
  %v190 = vpack.c.b16 %v179, %v178
  %v191 = vpack.c.b16 %v181, %v180
  %vm202 = vcmask 261120
  %v204 = vsel %vm202, %v116, 0
  %v207 = vsel %vm202, %v132, 0
  %v210 = vsel %vm202, %v138, 0
  %212 = vmatprep.subr.bf16.mxu0 0
  %213 = vmatpush1.bf16.msra.mxu0 %v182
  %214 = vmatprep.subr.bf16.mxu0 0
  %215 = vmatpush1.bf16.msra.mxu0 %v183
  %216 = vmatprep.subr.bf16.mxu0 0
  %217 = vmatpush1.bf16.msra.mxu0 %v184
  %218 = vmatprep.subr.bf16.mxu0 0
  %219 = vmatpush1.bf16.msra.mxu0 %v185
  %220 = vmatprep.subr.bf16.mxu0 0
  %221 = vmatpush1.bf16.msra.mxu0 %v186
  %222 = vmatprep.subr.bf16.mxu0 0
  %223 = vmatpush1.bf16.msra.mxu0 %v187
  %224 = vmatprep.subr.bf16.mxu0 0
  %225 = vmatpush1.bf16.msra.mxu0 %v188
  %226 = vmatprep.subr.bf16.mxu0 0
  %227 = vmatpush1.bf16.msra.mxu0 %v189
  %228 = vmatprep.subr.bf16.mxu0 0
  %229 = vmatpush1.bf16.msra.mxu0 %v190
  %230 = vmatprep.subr.bf16.mxu0 0
  %231 = vmatpush1.bf16.msra.mxu0 %v191
  %232 = vmatprep.subr.bf16.mxu0 0
  %233 = vmatpush1.bf16.msra.mxu0 0
  %234 = vmatprep.subr.bf16.mxu0 0
  %235 = vmatpush1.bf16.msra.mxu0 0
  %236 = vmatprep.subr.bf16.mxu0 0
  %237 = vmatpush1.bf16.msra.mxu0 0
  %238 = vmatprep.subr.bf16.mxu0 0
  %239 = vmatpush1.bf16.msra.mxu0 0
  %240 = vmatprep.subr.bf16.mxu0 0
  %241 = vmatpush1.bf16.msra.mxu0 0
  %242 = vmatprep.subr.bf16.mxu0 0
  %243 = vmatpush1.bf16.msra.mxu0 0
  %244 = vmatprep.mubr.bf16.mxu0 %v204
  %245 = vmatmul.mubr.bf16.gmra.mrb[0].mxu0 %v104
  %v246 = vpop.f32.mrb[0].mxu0
  %v247 = vadd.f32 0.0, %v246
  %v248 = vpop.f32.mrb[0].mxu0
  %v249 = vpop.f32.mrb[0].mxu0
  %v250 = vadd.f32 0.0, %v249
  %v251 = vpop.f32.mrb[0].mxu0
  %252 = vmatprep.mubr.bf16.mxu0 %v207
  %253 = vmatmul.mubr.bf16.gmra.mrb[0].mxu0 %v124
  %v254 = vpop.f32.mrb[0].mxu0
  %v255 = vadd.f32 0.0, %v254
  %v256 = vpop.f32.mrb[0].mxu0
  %v257 = vpop.f32.mrb[0].mxu0
  %v258 = vadd.f32 0.0, %v257
  %v259 = vpop.f32.mrb[0].mxu0
  %260 = vmatprep.mubr.bf16.mxu0 %v210
  %261 = vmatmul.mubr.bf16.gmra.mrb[0].mxu0 %v135
  %v262 = vpop.f32.mrb[0].mxu0
  %v263 = vadd.f32 0.0, %v262
  %v264 = vpop.f32.mrb[0].mxu0
  %v265 = vpop.f32.mrb[0].mxu0
  %v266 = vpop.f32.mrb[0].mxu0
  %267 = vdwg.mxu0
  %v268 = vpack.c.b16 %v82, %v82
  %v269 = vpack.c.b16 %v83, %v83
  %v293 = vunpack.c.l.b16 %v26
  %v294 = vunpack.c.l.b16 %v27
  %v295 = vunpack.c.l.b16 %v28
  %v296 = vunpack.c.l.b16 %v29
  %v297 = vunpack.c.l.b16 %v30
  %v298 = vunpack.c.l.b16 %v31
  %v299 = vunpack.c.l.b16 %v32
  %v300 = vunpack.c.l.b16 %v33
  %v301 = vunpack.c.l.b16 %v34
  %v302 = vunpack.c.l.b16 %v35
  %v303 = vunpack.c.l.b16 %v36
  %v304 = vunpack.c.l.b16 %v37
  %v305 = vunpack.c.l.b16 %v38
  %v306 = vunpack.c.l.b16 %v39
  %v307 = vunpack.c.l.b16 %v40
  %v308 = vunpack.c.l.b16 %v41
  %v309 = vunpack.c.l.b16 %v42
  %v310 = vunpack.c.l.b16 %v43
  %v311 = vunpack.c.l.b16 %v44
  %v312 = vunpack.c.l.b16 %v45
  %v313 = vpack.c.b16 %v294, %v293
  %v314 = vpack.c.b16 %v296, %v295
  %v315 = vpack.c.b16 %v298, %v297
  %v316 = vpack.c.b16 %v300, %v299
  %v317 = vpack.c.b16 %v302, %v301
  %v318 = vpack.c.b16 %v304, %v303
  %v319 = vpack.c.b16 %v306, %v305
  %v320 = vpack.c.b16 %v308, %v307
  %v321 = vpack.c.b16 %v310, %v309
  %v322 = vpack.c.b16 %v312, %v311
  %v333 = vsel %vm202, %v87, 0
  %v335 = vsel %vm202, %v89, 0
  %v338 = vsel %vm202, %v269, 0
  %340 = vmatprep.subr.bf16.mxu0 0
  %341 = vmatpush1.bf16.msra.mxu0 %v313
  %342 = vmatprep.subr.bf16.mxu0 0
  %343 = vmatpush1.bf16.msra.mxu0 %v314
  %344 = vmatprep.subr.bf16.mxu0 0
  %345 = vmatpush1.bf16.msra.mxu0 %v315
  %346 = vmatprep.subr.bf16.mxu0 0
  %347 = vmatpush1.bf16.msra.mxu0 %v316
  %348 = vmatprep.subr.bf16.mxu0 0
  %349 = vmatpush1.bf16.msra.mxu0 %v317
  %350 = vmatprep.subr.bf16.mxu0 0
  %351 = vmatpush1.bf16.msra.mxu0 %v318
  %352 = vmatprep.subr.bf16.mxu0 0
  %353 = vmatpush1.bf16.msra.mxu0 %v319
  %354 = vmatprep.subr.bf16.mxu0 0
  %355 = vmatpush1.bf16.msra.mxu0 %v320
  %356 = vmatprep.subr.bf16.mxu0 0
  %357 = vmatpush1.bf16.msra.mxu0 %v321
  %358 = vmatprep.subr.bf16.mxu0 0
  %359 = vmatpush1.bf16.msra.mxu0 %v322
  %360 = vmatprep.subr.bf16.mxu0 0
  %361 = vmatpush1.bf16.msra.mxu0 0
  %362 = vmatprep.subr.bf16.mxu0 0
  %363 = vmatpush1.bf16.msra.mxu0 0
  %364 = vmatprep.subr.bf16.mxu0 0
  %365 = vmatpush1.bf16.msra.mxu0 0
  %366 = vmatprep.subr.bf16.mxu0 0
  %367 = vmatpush1.bf16.msra.mxu0 0
  %368 = vmatprep.subr.bf16.mxu0 0
  %369 = vmatpush1.bf16.msra.mxu0 0
  %370 = vmatprep.subr.bf16.mxu0 0
  %371 = vmatpush1.bf16.msra.mxu0 0
  %372 = vmatprep.mubr.bf16.mxu0 %v333
  %373 = vmatmul.mubr.bf16.gmra.mrb[0].mxu0 %v86
  %v374 = vpop.f32.mrb[0].mxu0
  %v375 = vadd.f32 %v247, %v374
  %v376 = vpop.f32.mrb[0].mxu0
  %v377 = vpop.f32.mrb[0].mxu0
  %v378 = vadd.f32 %v250, %v377
  %v379 = vpop.f32.mrb[0].mxu0
  %380 = vmatprep.mubr.bf16.mxu0 %v335
  %381 = vmatmul.mubr.bf16.gmra.mrb[0].mxu0 %v88
  %v382 = vpop.f32.mrb[0].mxu0
  %v383 = vadd.f32 %v255, %v382
  %v384 = vpop.f32.mrb[0].mxu0
  %v385 = vpop.f32.mrb[0].mxu0
  %v386 = vadd.f32 %v258, %v385
  %v387 = vpop.f32.mrb[0].mxu0
  %388 = vmatprep.mubr.bf16.mxu0 %v338
  %389 = vmatmul.mubr.bf16.gmra.mrb[0].mxu0 %v268
  %v390 = vpop.f32.mrb[0].mxu0
  %v391 = vadd.f32 %v263, %v390
  %v392 = vpop.f32.mrb[0].mxu0
  %v393 = vpop.f32.mrb[0].mxu0
  %v394 = vpop.f32.mrb[0].mxu0
  %395 = vdwg.mxu0
  %v396 = vld [vmem:[%s0] sm:$0xee]
  %s397 = scalar_lea.vmem %s1, 160
  %v398 = vld [vmem:[%s397] sm:$0xf]
  %v399 = vld [vmem:[%s397 + $0x4] sm:$0xf]
  %v400 = vld [vmem:[%s397 + $0x8] sm:$0xf]
  %v401 = vld [vmem:[%s397 + $0xc] sm:$0xf]
  %v402 = vld [vmem:[%s397 + $0x10] sm:$0xf]
  %v403 = vld [vmem:[%s397 + $0x14] sm:$0xf]
  %v404 = vld [vmem:[%s397 + $0x18] sm:$0xf]
  %v405 = vld [vmem:[%s397 + $0x1c] sm:$0xf]
  %v406 = vld [vmem:[%s397 + $0x20] sm:$0xf]
  %v407 = vld [vmem:[%s397 + $0x24] sm:$0xf]
  %v408 = vld [vmem:[%s397 + $0x28] sm:$0xf]
  %v409 = vld [vmem:[%s397 + $0x2c] sm:$0xf]
  %v410 = vld [vmem:[%s397 + $0x30] sm:$0xf]
  %v411 = vld [vmem:[%s397 + $0x34] sm:$0xf]
  %v412 = vld [vmem:[%s397 + $0x38] sm:$0xf]
  %v413 = vld [vmem:[%s397 + $0x3c] sm:$0xf]
  %v414 = vld [vmem:[%s397 + $0x40] sm:$0xf]
  %v415 = vld [vmem:[%s397 + $0x44] sm:$0xf]
  %v416 = vld [vmem:[%s397 + $0x48] sm:$0xf]
  %v417 = vld [vmem:[%s397 + $0x4c] sm:$0xf]
  %v419 = vunpack.c.l.b16 %v396
  %v420 = vunpack.c.h.b16 %v396
  %v421 = vpack.c.b16 %v76, %v419
  %v422 = vpack.c.b16 %v77, %v420
  %vm423 = vcmask 1046528
  %v424 = vrot.slane %v421, 1
  %v425 = vrot.slane %v88, 1
  %v426 = vsel %vm423, %v424, %v425
  %v427 = vrot.slane %v422, 1
  %v428 = vrot.slane %v89, 1
  %v429 = vsel %vm423, %v427, %v428
  %v430 = vrot.slane %v90, 1
  %v431 = vsel %vm423, %v425, %v430
  %v432 = vrot.slane %v91, 1
  %v433 = vsel %vm423, %v428, %v432
  %v457 = vunpack.c.l.b16 %v398
  %v458 = vunpack.c.l.b16 %v399
  %v459 = vunpack.c.l.b16 %v400
  %v460 = vunpack.c.l.b16 %v401
  %v461 = vunpack.c.l.b16 %v402
  %v462 = vunpack.c.l.b16 %v403
  %v463 = vunpack.c.l.b16 %v404
  %v464 = vunpack.c.l.b16 %v405
  %v465 = vunpack.c.l.b16 %v406
  %v466 = vunpack.c.l.b16 %v407
  %v467 = vunpack.c.l.b16 %v408
  %v468 = vunpack.c.l.b16 %v409
  %v469 = vunpack.c.l.b16 %v410
  %v470 = vunpack.c.l.b16 %v411
  %v471 = vunpack.c.l.b16 %v412
  %v472 = vunpack.c.l.b16 %v413
  %v473 = vunpack.c.l.b16 %v414
  %v474 = vunpack.c.l.b16 %v415
  %v475 = vunpack.c.l.b16 %v416
  %v476 = vunpack.c.l.b16 %v417
  %v477 = vpack.c.b16 %v458, %v457
  %v478 = vpack.c.b16 %v460, %v459
  %v479 = vpack.c.b16 %v462, %v461
  %v480 = vpack.c.b16 %v464, %v463
  %v481 = vpack.c.b16 %v466, %v465
  %v482 = vpack.c.b16 %v468, %v467
  %v483 = vpack.c.b16 %v470, %v469
  %v484 = vpack.c.b16 %v472, %v471
  %v485 = vpack.c.b16 %v474, %v473
  %v486 = vpack.c.b16 %v476, %v475
  %v498 = vsel %vm202, %v429, 0
  %v501 = vsel %vm202, %v433, 0
  %v504 = vsel %vm202, %v432, 0
  %506 = vmatprep.subr.bf16.mxu0 0
  %507 = vmatpush1.bf16.msra.mxu0 %v477
  %508 = vmatprep.subr.bf16.mxu0 0
  %509 = vmatpush1.bf16.msra.mxu0 %v478
  %510 = vmatprep.subr.bf16.mxu0 0
  %511 = vmatpush1.bf16.msra.mxu0 %v479
  %512 = vmatprep.subr.bf16.mxu0 0
  %513 = vmatpush1.bf16.msra.mxu0 %v480
  %514 = vmatprep.subr.bf16.mxu0 0
  %515 = vmatpush1.bf16.msra.mxu0 %v481
  %516 = vmatprep.subr.bf16.mxu0 0
  %517 = vmatpush1.bf16.msra.mxu0 %v482
  %518 = vmatprep.subr.bf16.mxu0 0
  %519 = vmatpush1.bf16.msra.mxu0 %v483
  %520 = vmatprep.subr.bf16.mxu0 0
  %521 = vmatpush1.bf16.msra.mxu0 %v484
  %522 = vmatprep.subr.bf16.mxu0 0
  %523 = vmatpush1.bf16.msra.mxu0 %v485
  %524 = vmatprep.subr.bf16.mxu0 0
  %525 = vmatpush1.bf16.msra.mxu0 %v486
  %526 = vmatprep.subr.bf16.mxu0 0
  %527 = vmatpush1.bf16.msra.mxu0 0
  %528 = vmatprep.subr.bf16.mxu0 0
  %529 = vmatpush1.bf16.msra.mxu0 0
  %530 = vmatprep.subr.bf16.mxu0 0
  %531 = vmatpush1.bf16.msra.mxu0 0
  %532 = vmatprep.subr.bf16.mxu0 0
  %533 = vmatpush1.bf16.msra.mxu0 0
  %534 = vmatprep.subr.bf16.mxu0 0
  %535 = vmatpush1.bf16.msra.mxu0 0
  %536 = vmatprep.subr.bf16.mxu0 0
  %537 = vmatpush1.bf16.msra.mxu0 0
  %538 = vmatprep.mubr.bf16.mxu0 %v498
  %539 = vmatmul.mubr.bf16.gmra.mrb[0].mxu0 %v426
  %v540 = vpop.f32.mrb[0].mxu0
  %v541 = vadd.f32 0.0, %v540
  %v542 = vpop.f32.mrb[0].mxu0
  %v543 = vpop.f32.mrb[0].mxu0
  %v544 = vadd.f32 0.0, %v543
  %v545 = vpop.f32.mrb[0].mxu0
  %546 = vmatprep.mubr.bf16.mxu0 %v501
  %547 = vmatmul.mubr.bf16.gmra.mrb[0].mxu0 %v431
  %v548 = vpop.f32.mrb[0].mxu0
  %v549 = vadd.f32 0.0, %v548
  %v550 = vpop.f32.mrb[0].mxu0
  %v551 = vpop.f32.mrb[0].mxu0
  %v552 = vadd.f32 0.0, %v551
  %v553 = vpop.f32.mrb[0].mxu0
  %554 = vmatprep.mubr.bf16.mxu0 %v504
  %555 = vmatmul.mubr.bf16.gmra.mrb[0].mxu0 %v430
  %v556 = vpop.f32.mrb[0].mxu0
  %v557 = vadd.f32 0.0, %v556
  %v558 = vpop.f32.mrb[0].mxu0
  %v559 = vpop.f32.mrb[0].mxu0
  %v560 = vpop.f32.mrb[0].mxu0
  %561 = vdwg.mxu0
  %v562 = vadd.f32 %v375, %v541
  %v563 = vadd.f32 %v378, %v544
  %v564 = vadd.f32 %v383, %v549
  %v565 = vadd.f32 %v386, %v552
  %v566 = vadd.f32 %v391, %v557
  %v567 = vld [vmem:[%s0 + $0x28] sm:$0x33]
  %s568 = scalar_lea.vmem %s1, 240
  %v569 = vld [vmem:[%s568] sm:$0xf]
  %v570 = vld [vmem:[%s568 + $0x4] sm:$0xf]
  %v571 = vld [vmem:[%s568 + $0x8] sm:$0xf]
  %v572 = vld [vmem:[%s568 + $0xc] sm:$0xf]
  %v573 = vld [vmem:[%s568 + $0x10] sm:$0xf]
  %v574 = vld [vmem:[%s568 + $0x14] sm:$0xf]
  %v575 = vld [vmem:[%s568 + $0x18] sm:$0xf]
  %v576 = vld [vmem:[%s568 + $0x1c] sm:$0xf]
  %v577 = vld [vmem:[%s568 + $0x20] sm:$0xf]
  %v578 = vld [vmem:[%s568 + $0x24] sm:$0xf]
  %v579 = vld [vmem:[%s568 + $0x28] sm:$0xf]
  %v580 = vld [vmem:[%s568 + $0x2c] sm:$0xf]
  %v581 = vld [vmem:[%s568 + $0x30] sm:$0xf]
  %v582 = vld [vmem:[%s568 + $0x34] sm:$0xf]
  %v583 = vld [vmem:[%s568 + $0x38] sm:$0xf]
  %v584 = vld [vmem:[%s568 + $0x3c] sm:$0xf]
  %v585 = vld [vmem:[%s568 + $0x40] sm:$0xf]
  %v586 = vld [vmem:[%s568 + $0x44] sm:$0xf]
  %v587 = vld [vmem:[%s568 + $0x48] sm:$0xf]
  %v588 = vld [vmem:[%s568 + $0x4c] sm:$0xf]
  %v590 = vunpack.c.l.b16 %v567
  %v591 = vunpack.c.h.b16 %v567
  %v592 = vpack.c.b16 %v590, %v82
  %v593 = vpack.c.b16 %v591, %v83
  %vm594 = vsmask.f32 6400
  %v596 = vshrl.u32 %v421, 16
  %v598 = vrot.slane %v596, 1
  %v599 = vshll.u32 %v421, 16
  %v601 = vrot.slane %v599, 2
  %v602 = vor.u32 %v598, %v601
  %v603 = vrot.slane %v117, 1
  %v604 = vrot.slane %v101, 2
  %v605 = vor.u32 %v603, %v604
  %v606 = vsel %vm594, %v602, %v605
  %v608 = vshrl.u32 %v422, 16
  %v610 = vrot.slane %v608, 1
  %v611 = vshll.u32 %v422, 16
  %v613 = vrot.slane %v611, 2
  %v614 = vor.u32 %v610, %v613
  %v615 = vrot.slane %v125, 1
  %v616 = vrot.slane %v113, 2
  %v617 = vor.u32 %v615, %v616
  %v618 = vsel %vm594, %v614, %v617
  %v620 = vshrl.u32 %v592, 16
  %v622 = vrot.slane %v620, 1
  %v623 = vshll.u32 %v592, 16
  %v625 = vrot.slane %v623, 2
  %v626 = vor.u32 %v622, %v625
  %v627 = vsel %vm594, %v605, %v626
  %v629 = vshrl.u32 %v593, 16
  %v631 = vrot.slane %v629, 1
  %v632 = vshll.u32 %v593, 16
  %v634 = vrot.slane %v632, 2
  %v635 = vor.u32 %v631, %v634
  %v636 = vsel %vm594, %v617, %v635
  %v660 = vunpack.c.l.b16 %v569
  %v661 = vunpack.c.l.b16 %v570
  %v662 = vunpack.c.l.b16 %v571
  %v663 = vunpack.c.l.b16 %v572
  %v664 = vunpack.c.l.b16 %v573
  %v665 = vunpack.c.l.b16 %v574
  %v666 = vunpack.c.l.b16 %v575
  %v667 = vunpack.c.l.b16 %v576
  %v668 = vunpack.c.l.b16 %v577
  %v669 = vunpack.c.l.b16 %v578
  %v670 = vunpack.c.l.b16 %v579
  %v671 = vunpack.c.l.b16 %v580
  %v672 = vunpack.c.l.b16 %v581
  %v673 = vunpack.c.l.b16 %v582
  %v674 = vunpack.c.l.b16 %v583
  %v675 = vunpack.c.l.b16 %v584
  %v676 = vunpack.c.l.b16 %v585
  %v677 = vunpack.c.l.b16 %v586
  %v678 = vunpack.c.l.b16 %v587
  %v679 = vunpack.c.l.b16 %v588
  %v680 = vpack.c.b16 %v661, %v660
  %v681 = vpack.c.b16 %v663, %v662
  %v682 = vpack.c.b16 %v665, %v664
  %v683 = vpack.c.b16 %v667, %v666
  %v684 = vpack.c.b16 %v669, %v668
  %v685 = vpack.c.b16 %v671, %v670
  %v686 = vpack.c.b16 %v673, %v672
  %v687 = vpack.c.b16 %v675, %v674
  %v688 = vpack.c.b16 %v677, %v676
  %v689 = vpack.c.b16 %v679, %v678
  %v701 = vsel %vm202, %v618, 0
  %v704 = vsel %vm202, %v636, 0
  %v707 = vsel %vm202, %v635, 0
  %709 = vmatprep.subr.bf16.mxu0 0
  %710 = vmatpush1.bf16.msra.mxu0 %v680
  %711 = vmatprep.subr.bf16.mxu0 0
  %712 = vmatpush1.bf16.msra.mxu0 %v681
  %713 = vmatprep.subr.bf16.mxu0 0
  %714 = vmatpush1.bf16.msra.mxu0 %v682
  %715 = vmatprep.subr.bf16.mxu0 0
  %716 = vmatpush1.bf16.msra.mxu0 %v683
  %717 = vmatprep.subr.bf16.mxu0 0
  %718 = vmatpush1.bf16.msra.mxu0 %v684
  %719 = vmatprep.subr.bf16.mxu0 0
  %720 = vmatpush1.bf16.msra.mxu0 %v685
  %721 = vmatprep.subr.bf16.mxu0 0
  %722 = vmatpush1.bf16.msra.mxu0 %v686
  %723 = vmatprep.subr.bf16.mxu0 0
  %724 = vmatpush1.bf16.msra.mxu0 %v687
  %725 = vmatprep.subr.bf16.mxu0 0
  %726 = vmatpush1.bf16.msra.mxu0 %v688
  %727 = vmatprep.subr.bf16.mxu0 0
  %728 = vmatpush1.bf16.msra.mxu0 %v689
  %729 = vmatprep.subr.bf16.mxu0 0
  %730 = vmatpush1.bf16.msra.mxu0 0
  %731 = vmatprep.subr.bf16.mxu0 0
  %732 = vmatpush1.bf16.msra.mxu0 0
  %733 = vmatprep.subr.bf16.mxu0 0
  %734 = vmatpush1.bf16.msra.mxu0 0
  %735 = vmatprep.subr.bf16.mxu0 0
  %736 = vmatpush1.bf16.msra.mxu0 0
  %737 = vmatprep.subr.bf16.mxu0 0
  %738 = vmatpush1.bf16.msra.mxu0 0
  %739 = vmatprep.subr.bf16.mxu0 0
  %740 = vmatpush1.bf16.msra.mxu0 0
  %741 = vmatprep.mubr.bf16.mxu0 %v701
  %742 = vmatmul.mubr.bf16.gmra.mrb[0].mxu0 %v606
  %v743 = vpop.f32.mrb[0].mxu0
  %v744 = vadd.f32 0.0, %v743
  %v745 = vpop.f32.mrb[0].mxu0
  %v746 = vpop.f32.mrb[0].mxu0
  %v747 = vadd.f32 0.0, %v746
  %v748 = vpop.f32.mrb[0].mxu0
  %749 = vmatprep.mubr.bf16.mxu0 %v704
  %750 = vmatmul.mubr.bf16.gmra.mrb[0].mxu0 %v627
  %v751 = vpop.f32.mrb[0].mxu0
  %v752 = vadd.f32 0.0, %v751
  %v753 = vpop.f32.mrb[0].mxu0
  %v754 = vpop.f32.mrb[0].mxu0
  %v755 = vadd.f32 0.0, %v754
  %v756 = vpop.f32.mrb[0].mxu0
  %757 = vmatprep.mubr.bf16.mxu0 %v707
  %758 = vmatmul.mubr.bf16.gmra.mrb[0].mxu0 %v626
  %v759 = vpop.f32.mrb[0].mxu0
  %v760 = vadd.f32 0.0, %v759
  %v761 = vpop.f32.mrb[0].mxu0
  %v762 = vpop.f32.mrb[0].mxu0
  %v763 = vpop.f32.mrb[0].mxu0
  %764 = vdwg.mxu0
  %v765 = vadd.f32 %v562, %v744
  %v766 = vadd.f32 %v563, %v747
  %v767 = vadd.f32 %v564, %v752
  %v768 = vadd.f32 %v565, %v755
  %v769 = vadd.f32 %v566, %v760
  %v770 = vld [vmem:[%s0] sm:$0xcc]
  %s771 = scalar_lea.vmem %s1, 320
  %v772 = vld [vmem:[%s771] sm:$0xf]
  %v773 = vld [vmem:[%s771 + $0x4] sm:$0xf]
  %v774 = vld [vmem:[%s771 + $0x8] sm:$0xf]
  %v775 = vld [vmem:[%s771 + $0xc] sm:$0xf]
  %v776 = vld [vmem:[%s771 + $0x10] sm:$0xf]
  %v777 = vld [vmem:[%s771 + $0x14] sm:$0xf]
  %v778 = vld [vmem:[%s771 + $0x18] sm:$0xf]
  %v779 = vld [vmem:[%s771 + $0x1c] sm:$0xf]
  %v780 = vld [vmem:[%s771 + $0x20] sm:$0xf]
  %v781 = vld [vmem:[%s771 + $0x24] sm:$0xf]
  %v782 = vld [vmem:[%s771 + $0x28] sm:$0xf]
  %v783 = vld [vmem:[%s771 + $0x2c] sm:$0xf]
  %v784 = vld [vmem:[%s771 + $0x30] sm:$0xf]
  %v785 = vld [vmem:[%s771 + $0x34] sm:$0xf]
  %v786 = vld [vmem:[%s771 + $0x38] sm:$0xf]
  %v787 = vld [vmem:[%s771 + $0x3c] sm:$0xf]
  %v788 = vld [vmem:[%s771 + $0x40] sm:$0xf]
  %v789 = vld [vmem:[%s771 + $0x44] sm:$0xf]
  %v790 = vld [vmem:[%s771 + $0x48] sm:$0xf]
  %v791 = vld [vmem:[%s771 + $0x4c] sm:$0xf]
  %v793 = vunpack.c.l.b16 %v770
  %v794 = vunpack.c.h.b16 %v770
  %v795 = vpack.c.b16 %v76, %v793
  %v796 = vpack.c.b16 %v77, %v794
  %vm797 = vcmask 1045504
  %v798 = vrot.slane %v795, 2
  %v799 = vrot.slane %v88, 2
  %v800 = vsel %vm797, %v798, %v799
  %v801 = vrot.slane %v796, 2
  %v802 = vrot.slane %v89, 2
  %v803 = vsel %vm797, %v801, %v802
  %v804 = vrot.slane %v592, 2
  %v805 = vsel %vm797, %v799, %v804
  %v806 = vrot.slane %v593, 2
  %v807 = vsel %vm797, %v802, %v806
  %v831 = vunpack.c.l.b16 %v772
  %v832 = vunpack.c.l.b16 %v773
  %v833 = vunpack.c.l.b16 %v774
  %v834 = vunpack.c.l.b16 %v775
  %v835 = vunpack.c.l.b16 %v776
  %v836 = vunpack.c.l.b16 %v777
  %v837 = vunpack.c.l.b16 %v778
  %v838 = vunpack.c.l.b16 %v779
  %v839 = vunpack.c.l.b16 %v780
  %v840 = vunpack.c.l.b16 %v781
  %v841 = vunpack.c.l.b16 %v782
  %v842 = vunpack.c.l.b16 %v783
  %v843 = vunpack.c.l.b16 %v784
  %v844 = vunpack.c.l.b16 %v785
  %v845 = vunpack.c.l.b16 %v786
  %v846 = vunpack.c.l.b16 %v787
  %v847 = vunpack.c.l.b16 %v788
  %v848 = vunpack.c.l.b16 %v789
  %v849 = vunpack.c.l.b16 %v790
  %v850 = vunpack.c.l.b16 %v791
  %v851 = vpack.c.b16 %v832, %v831
  %v852 = vpack.c.b16 %v834, %v833
  %v853 = vpack.c.b16 %v836, %v835
  %v854 = vpack.c.b16 %v838, %v837
  %v855 = vpack.c.b16 %v840, %v839
  %v856 = vpack.c.b16 %v842, %v841
  %v857 = vpack.c.b16 %v844, %v843
  %v858 = vpack.c.b16 %v846, %v845
  %v859 = vpack.c.b16 %v848, %v847
  %v860 = vpack.c.b16 %v850, %v849
  %v872 = vsel %vm202, %v803, 0
  %v875 = vsel %vm202, %v807, 0
  %v878 = vsel %vm202, %v806, 0
  %880 = vmatprep.subr.bf16.mxu0 0
  %881 = vmatpush1.bf16.msra.mxu0 %v851
  %882 = vmatprep.subr.bf16.mxu0 0
  %883 = vmatpush1.bf16.msra.mxu0 %v852
  %884 = vmatprep.subr.bf16.mxu0 0
  %885 = vmatpush1.bf16.msra.mxu0 %v853
  %886 = vmatprep.subr.bf16.mxu0 0
  %887 = vmatpush1.bf16.msra.mxu0 %v854
  %888 = vmatprep.subr.bf16.mxu0 0
  %889 = vmatpush1.bf16.msra.mxu0 %v855
  %890 = vmatprep.subr.bf16.mxu0 0
  %891 = vmatpush1.bf16.msra.mxu0 %v856
  %892 = vmatprep.subr.bf16.mxu0 0
  %893 = vmatpush1.bf16.msra.mxu0 %v857
  %894 = vmatprep.subr.bf16.mxu0 0
  %895 = vmatpush1.bf16.msra.mxu0 %v858
  %896 = vmatprep.subr.bf16.mxu0 0
  %897 = vmatpush1.bf16.msra.mxu0 %v859
  %898 = vmatprep.subr.bf16.mxu0 0
  %899 = vmatpush1.bf16.msra.mxu0 %v860
  %900 = vmatprep.subr.bf16.mxu0 0
  %901 = vmatpush1.bf16.msra.mxu0 0
  %902 = vmatprep.subr.bf16.mxu0 0
  %903 = vmatpush1.bf16.msra.mxu0 0
  %904 = vmatprep.subr.bf16.mxu0 0
  %905 = vmatpush1.bf16.msra.mxu0 0
  %906 = vmatprep.subr.bf16.mxu0 0
  %907 = vmatpush1.bf16.msra.mxu0 0
  %908 = vmatprep.subr.bf16.mxu0 0
  %909 = vmatpush1.bf16.msra.mxu0 0
  %910 = vmatprep.subr.bf16.mxu0 0
  %911 = vmatpush1.bf16.msra.mxu0 0
  %912 = vmatprep.mubr.bf16.mxu0 %v872
  %913 = vmatmul.mubr.bf16.gmra.mrb[0].mxu0 %v800
  %v914 = vpop.f32.mrb[0].mxu0
  %v915 = vadd.f32 0.0, %v914
  %v916 = vpop.f32.mrb[0].mxu0
  %v917 = vpop.f32.mrb[0].mxu0
  %v918 = vadd.f32 0.0, %v917
  %v919 = vpop.f32.mrb[0].mxu0
  %920 = vmatprep.mubr.bf16.mxu0 %v875
  %921 = vmatmul.mubr.bf16.gmra.mrb[0].mxu0 %v805
  %v922 = vpop.f32.mrb[0].mxu0
  %v923 = vadd.f32 0.0, %v922
  %v924 = vpop.f32.mrb[0].mxu0
  %v925 = vpop.f32.mrb[0].mxu0
  %v926 = vadd.f32 0.0, %v925
  %v927 = vpop.f32.mrb[0].mxu0
  %928 = vmatprep.mubr.bf16.mxu0 %v878
  %929 = vmatmul.mubr.bf16.gmra.mrb[0].mxu0 %v804
  %v930 = vpop.f32.mrb[0].mxu0
  %v931 = vadd.f32 0.0, %v930
  %v932 = vpop.f32.mrb[0].mxu0
  %v933 = vpop.f32.mrb[0].mxu0
  %v934 = vpop.f32.mrb[0].mxu0
  %935 = vdwg.mxu0
  %v936 = vadd.f32 %v765, %v915
  %v937 = vadd.f32 %v766, %v918
  %v938 = vadd.f32 %v767, %v923
  %v939 = vadd.f32 %v768, %v926
  %v940 = vadd.f32 %v769, %v931
  %v941 = vld [vmem:[%s2] sm:$0x1]
  %v943 = vlaneseq
  %v944 = vshrl.u32 %v943, 7
  %v945 = vsub.s32 0, %v944
  %v946 = vrot.slane %v941, %v945
  %v948 = vadd.f32 %v936, %v946
  %v949 = vadd.f32 %v937, %v946
  %v950 = vadd.f32 %v938, %v946
  %v951 = vadd.f32 %v939, %v946
  %v952 = vadd.f32 %v940, %v946
  %v953 = vmax.f32 %v948, 0.0
  %v954 = vmax.f32 %v949, 0.0
  %v955 = vmax.f32 %v950, 0.0
  %v956 = vmax.f32 %v951, 0.0
  %v957 = vmax.f32 %v952, 0.0
  %958 = vst [vmem:[#allocation2] sm:$0xff] %v953
  %959 = vst [vmem:[#allocation2 + $0x8] sm:$0xff] %v954
  %960 = vst [vmem:[#allocation2 + $0x10] sm:$0xff] %v955
  %961 = vst [vmem:[#allocation2 + $0x18] sm:$0xff] %v956
  %962 = vst [vmem:[#allocation2 + $0x20] sm:$0xff] %v957
  %v963 = vld [vmem:[#allocation2] ss:$2 sm:$0xff]
  %s964 = scalar_lea.vmem [#allocation2], 16
  %v965 = vld [vmem:[%s964] ss:$2 sm:$0xff]
  %s966 = scalar_lea.vmem [#allocation2], 32
  %v967 = vld [vmem:[%s966] ss:$2 sm:$0xf]
  %s968 = scalar_lea.vmem [#allocation2], 1
  %v969 = vld [vmem:[%s968] ss:$2 sm:$0xff]
  %s970 = scalar_lea.vmem [#allocation2], 17
  %v971 = vld [vmem:[%s970] ss:$2 sm:$0xff]
  %s972 = scalar_lea.vmem [#allocation2], 33
  %v973 = vld [vmem:[%s972] ss:$2 sm:$0xf]
  %v974 = vmax.f32 %v963, %v969
  %v975 = vmax.f32 %v965, %v971
  %v976 = vmax.f32 %v967, %v973
  %977 = vrot.lane.b32.xlu0 %v974, 120
  %v978 = vpop.permute.xlu0 %977
  %979 = vrot.lane.b32.xlu0 %v975, 120
  %v980 = vpop.permute.xlu0 %979
  %981 = vrot.lane.b32.xlu0 %v976, 120
  %v982 = vpop.permute.xlu0 %981
  %v983 = vmax.f32 %v974, %v978
  %v984 = vmax.f32 %v975, %v980
  %v985 = vmax.f32 %v976, %v982
  %986 = vst [vmem:[#allocation3] sm:$0xff] %v983
  %987 = vst [vmem:[#allocation3 + $0x8] sm:$0xff] %v984
  %988 = vst [vmem:[#allocation3 + $0x10] sm:$0xf] %v985
  %v989 = vld [vmem:[#allocation3] sm:$0xff]
  %v990 = vld [vmem:[#allocation3 + $0x8] sm:$0xff]
  %v991 = vpack.c.bf16 %v990, %v989
  %v992 = vld [vmem:[%s3] sm:$0xf]
  %v993 = vld [vmem:[%s3 + $0x4] sm:$0xf]
  %v994 = vld [vmem:[%s3 + $0x8] sm:$0xf]
  %v995 = vld [vmem:[%s3 + $0xc] sm:$0xf]
  %v996 = vld [vmem:[%s3 + $0x10] sm:$0xf]
  %v997 = vld [vmem:[%s3 + $0x14] sm:$0xf]
  %v998 = vld [vmem:[%s3 + $0x18] sm:$0xf]
  %v999 = vld [vmem:[%s3 + $0x1c] sm:$0xf]
  %v1000 = vld [vmem:[%s3 + $0x20] sm:$0xf]
  %v1001 = vld [vmem:[%s3 + $0x24] sm:$0xf]
  %v1002 = vld [vmem:[%s3 + $0x28] sm:$0xf]
  %v1003 = vld [vmem:[%s3 + $0x2c] sm:$0xf]
  %v1004 = vld [vmem:[%s3 + $0x30] sm:$0xf]
  %v1005 = vld [vmem:[%s3 + $0x34] sm:$0xf]
  %v1006 = vld [vmem:[%s3 + $0x38] sm:$0xf]
  %v1007 = vld [vmem:[%s3 + $0x3c] sm:$0xf]
  %v1008 = vld [vmem:[#allocation3 + $0x1] sm:$0xff]
  %v1009 = vld [vmem:[#allocation3 + $0x9] sm:$0xff]
  %v1010 = vpack.c.bf16 %v1009, %v1008
  %s1011 = scalar_lea.vmem %s3, 64
  %v1012 = vld [vmem:[%s1011] sm:$0xf]
  %v1013 = vld [vmem:[%s1011 + $0x4] sm:$0xf]
  %v1014 = vld [vmem:[%s1011 + $0x8] sm:$0xf]
  %v1015 = vld [vmem:[%s1011 + $0xc] sm:$0xf]
  %v1016 = vld [vmem:[%s1011 + $0x10] sm:$0xf]
  %v1017 = vld [vmem:[%s1011 + $0x14] sm:$0xf]
  %v1018 = vld [vmem:[%s1011 + $0x18] sm:$0xf]
  %v1019 = vld [vmem:[%s1011 + $0x1c] sm:$0xf]
  %v1020 = vld [vmem:[%s1011 + $0x20] sm:$0xf]
  %v1021 = vld [vmem:[%s1011 + $0x24] sm:$0xf]
  %v1022 = vld [vmem:[%s1011 + $0x28] sm:$0xf]
  %v1023 = vld [vmem:[%s1011 + $0x2c] sm:$0xf]
  %v1024 = vld [vmem:[%s1011 + $0x30] sm:$0xf]
  %v1025 = vld [vmem:[%s1011 + $0x34] sm:$0xf]
  %v1026 = vld [vmem:[%s1011 + $0x38] sm:$0xf]
  %v1027 = vld [vmem:[%s1011 + $0x3c] sm:$0xf]
  %v1044 = vunpack.c.l.b16 %v1012
  %v1045 = vunpack.c.l.b16 %v1013
  %v1046 = vunpack.c.l.b16 %v1014
  %v1047 = vunpack.c.l.b16 %v1015
  %v1048 = vunpack.c.l.b16 %v1016
  %v1049 = vunpack.c.l.b16 %v1017
  %v1050 = vunpack.c.l.b16 %v1018
  %v1051 = vunpack.c.l.b16 %v1019
  %v1052 = vunpack.c.l.b16 %v1020
  %v1053 = vunpack.c.l.b16 %v1021
  %v1054 = vunpack.c.l.b16 %v1022
  %v1055 = vunpack.c.l.b16 %v1023
  %v1056 = vunpack.c.l.b16 %v1024
  %v1057 = vunpack.c.l.b16 %v1025
  %v1058 = vunpack.c.l.b16 %v1026
  %v1059 = vunpack.c.l.b16 %v1027
  %v1060 = vpack.c.b16 %v1045, %v1044
  %v1061 = vpack.c.b16 %v1047, %v1046
  %v1062 = vpack.c.b16 %v1049, %v1048
  %v1063 = vpack.c.b16 %v1051, %v1050
  %v1064 = vpack.c.b16 %v1053, %v1052
  %v1065 = vpack.c.b16 %v1055, %v1054
  %v1066 = vpack.c.b16 %v1057, %v1056
  %v1067 = vpack.c.b16 %v1059, %v1058
  %1076 = vmatprep.subr.bf16.mxu0 0
  %1077 = vmatpush1.bf16.msra.mxu0 %v1060
  %1078 = vmatprep.subr.bf16.mxu0 0
  %1079 = vmatpush1.bf16.msra.mxu0 %v1061
  %1080 = vmatprep.subr.bf16.mxu0 0
  %1081 = vmatpush1.bf16.msra.mxu0 %v1062
  %1082 = vmatprep.subr.bf16.mxu0 0
  %1083 = vmatpush1.bf16.msra.mxu0 %v1063
  %1084 = vmatprep.subr.bf16.mxu0 0
  %1085 = vmatpush1.bf16.msra.mxu0 %v1064
  %1086 = vmatprep.subr.bf16.mxu0 0
  %1087 = vmatpush1.bf16.msra.mxu0 %v1065
  %1088 = vmatprep.subr.bf16.mxu0 0
  %1089 = vmatpush1.bf16.msra.mxu0 %v1066
  %1090 = vmatprep.subr.bf16.mxu0 0
  %1091 = vmatpush1.bf16.msra.mxu0 %v1067
  %1092 = vmatprep.subr.bf16.mxu0 0
  %1093 = vmatpush1.bf16.msra.mxu0 0
  %1094 = vmatprep.subr.bf16.mxu0 0
  %1095 = vmatpush1.bf16.msra.mxu0 0
  %1096 = vmatprep.subr.bf16.mxu0 0
  %1097 = vmatpush1.bf16.msra.mxu0 0
  %1098 = vmatprep.subr.bf16.mxu0 0
  %1099 = vmatpush1.bf16.msra.mxu0 0
  %1100 = vmatprep.subr.bf16.mxu0 0
  %1101 = vmatpush1.bf16.msra.mxu0 0
  %1102 = vmatprep.subr.bf16.mxu0 0
  %1103 = vmatpush1.bf16.msra.mxu0 0
  %1104 = vmatprep.subr.bf16.mxu0 0
  %1105 = vmatpush1.bf16.msra.mxu0 0
  %1106 = vmatprep.subr.bf16.mxu0 0
  %1107 = vmatpush1.bf16.msra.mxu0 0
  %1108 = vmatprep.mubr.bf16.mxu0 0
  %1109 = vmatmul.mubr.bf16.gmra.mrb[0].mxu0 %v1010
  %v1110 = vpop.f32.mrb[0].mxu0
  %v1111 = vadd.f32 0.0, %v1110
  %v1112 = vpop.f32.mrb[0].mxu0
  %v1113 = vpop.f32.mrb[0].mxu0
  %v1114 = vadd.f32 0.0, %v1113
  %v1115 = vpop.f32.mrb[0].mxu0
  %1116 = vdwg.mxu0
  %v1133 = vunpack.c.l.b16 %v992
  %v1134 = vunpack.c.l.b16 %v993
  %v1135 = vunpack.c.l.b16 %v994
  %v1136 = vunpack.c.l.b16 %v995
  %v1137 = vunpack.c.l.b16 %v996
  %v1138 = vunpack.c.l.b16 %v997
  %v1139 = vunpack.c.l.b16 %v998
  %v1140 = vunpack.c.l.b16 %v999
  %v1141 = vunpack.c.l.b16 %v1000
  %v1142 = vunpack.c.l.b16 %v1001
  %v1143 = vunpack.c.l.b16 %v1002
  %v1144 = vunpack.c.l.b16 %v1003
  %v1145 = vunpack.c.l.b16 %v1004
  %v1146 = vunpack.c.l.b16 %v1005
  %v1147 = vunpack.c.l.b16 %v1006
  %v1148 = vunpack.c.l.b16 %v1007
  %v1149 = vpack.c.b16 %v1134, %v1133
  %v1150 = vpack.c.b16 %v1136, %v1135
  %v1151 = vpack.c.b16 %v1138, %v1137
  %v1152 = vpack.c.b16 %v1140, %v1139
  %v1153 = vpack.c.b16 %v1142, %v1141
  %v1154 = vpack.c.b16 %v1144, %v1143
  %v1155 = vpack.c.b16 %v1146, %v1145
  %v1156 = vpack.c.b16 %v1148, %v1147
  %1165 = vmatprep.subr.bf16.mxu0 0
  %1166 = vmatpush1.bf16.msra.mxu0 %v1149
  %1167 = vmatprep.subr.bf16.mxu0 0
  %1168 = vmatpush1.bf16.msra.mxu0 %v1150
  %1169 = vmatprep.subr.bf16.mxu0 0
  %1170 = vmatpush1.bf16.msra.mxu0 %v1151
  %1171 = vmatprep.subr.bf16.mxu0 0
  %1172 = vmatpush1.bf16.msra.mxu0 %v1152
  %1173 = vmatprep.subr.bf16.mxu0 0
  %1174 = vmatpush1.bf16.msra.mxu0 %v1153
  %1175 = vmatprep.subr.bf16.mxu0 0
  %1176 = vmatpush1.bf16.msra.mxu0 %v1154
  %1177 = vmatprep.subr.bf16.mxu0 0
  %1178 = vmatpush1.bf16.msra.mxu0 %v1155
  %1179 = vmatprep.subr.bf16.mxu0 0
  %1180 = vmatpush1.bf16.msra.mxu0 %v1156
  %1181 = vmatprep.subr.bf16.mxu0 0
  %1182 = vmatpush1.bf16.msra.mxu0 0
  %1183 = vmatprep.subr.bf16.mxu0 0
  %1184 = vmatpush1.bf16.msra.mxu0 0
  %1185 = vmatprep.subr.bf16.mxu0 0
  %1186 = vmatpush1.bf16.msra.mxu0 0
  %1187 = vmatprep.subr.bf16.mxu0 0
  %1188 = vmatpush1.bf16.msra.mxu0 0
  %1189 = vmatprep.subr.bf16.mxu0 0
  %1190 = vmatpush1.bf16.msra.mxu0 0
  %1191 = vmatprep.subr.bf16.mxu0 0
  %1192 = vmatpush1.bf16.msra.mxu0 0
  %1193 = vmatprep.subr.bf16.mxu0 0
  %1194 = vmatpush1.bf16.msra.mxu0 0
  %1195 = vmatprep.subr.bf16.mxu0 0
  %1196 = vmatpush1.bf16.msra.mxu0 0
  %1197 = vmatprep.mubr.bf16.mxu0 0
  %1198 = vmatmul.mubr.bf16.gmra.mrb[0].mxu0 %v991
  %v1199 = vpop.f32.mrb[0].mxu0
  %v1200 = vadd.f32 %v1111, %v1199
  %v1201 = vpop.f32.mrb[0].mxu0
  %v1202 = vpop.f32.mrb[0].mxu0
  %v1203 = vadd.f32 %v1114, %v1202
  %v1204 = vpop.f32.mrb[0].mxu0
  %1205 = vdwg.mxu0
  %v1206 = vld [vmem:[#allocation3 + $0x2] sm:$0xff]
  %v1207 = vld [vmem:[#allocation3 + $0xa] sm:$0xff]
  %v1208 = vpack.c.bf16 %v1207, %v1206
  %s1209 = scalar_lea.vmem %s3, 128
  %v1210 = vld [vmem:[%s1209] sm:$0xf]
  %v1211 = vld [vmem:[%s1209 + $0x4] sm:$0xf]
  %v1212 = vld [vmem:[%s1209 + $0x8] sm:$0xf]
  %v1213 = vld [vmem:[%s1209 + $0xc] sm:$0xf]
  %v1214 = vld [vmem:[%s1209 + $0x10] sm:$0xf]
  %v1215 = vld [vmem:[%s1209 + $0x14] sm:$0xf]
  %v1216 = vld [vmem:[%s1209 + $0x18] sm:$0xf]
  %v1217 = vld [vmem:[%s1209 + $0x1c] sm:$0xf]
  %v1218 = vld [vmem:[%s1209 + $0x20] sm:$0xf]
  %v1219 = vld [vmem:[%s1209 + $0x24] sm:$0xf]
  %v1220 = vld [vmem:[%s1209 + $0x28] sm:$0xf]
  %v1221 = vld [vmem:[%s1209 + $0x2c] sm:$0xf]
  %v1222 = vld [vmem:[%s1209 + $0x30] sm:$0xf]
  %v1223 = vld [vmem:[%s1209 + $0x34] sm:$0xf]
  %v1224 = vld [vmem:[%s1209 + $0x38] sm:$0xf]
  %v1225 = vld [vmem:[%s1209 + $0x3c] sm:$0xf]
  %v1242 = vunpack.c.l.b16 %v1210
  %v1243 = vunpack.c.l.b16 %v1211
  %v1244 = vunpack.c.l.b16 %v1212
  %v1245 = vunpack.c.l.b16 %v1213
  %v1246 = vunpack.c.l.b16 %v1214
  %v1247 = vunpack.c.l.b16 %v1215
  %v1248 = vunpack.c.l.b16 %v1216
  %v1249 = vunpack.c.l.b16 %v1217
  %v1250 = vunpack.c.l.b16 %v1218
  %v1251 = vunpack.c.l.b16 %v1219
  %v1252 = vunpack.c.l.b16 %v1220
  %v1253 = vunpack.c.l.b16 %v1221
  %v1254 = vunpack.c.l.b16 %v1222
  %v1255 = vunpack.c.l.b16 %v1223
  %v1256 = vunpack.c.l.b16 %v1224
  %v1257 = vunpack.c.l.b16 %v1225
  %v1258 = vpack.c.b16 %v1243, %v1242
  %v1259 = vpack.c.b16 %v1245, %v1244
  %v1260 = vpack.c.b16 %v1247, %v1246
  %v1261 = vpack.c.b16 %v1249, %v1248
  %v1262 = vpack.c.b16 %v1251, %v1250
  %v1263 = vpack.c.b16 %v1253, %v1252
  %v1264 = vpack.c.b16 %v1255, %v1254
  %v1265 = vpack.c.b16 %v1257, %v1256
  %1274 = vmatprep.subr.bf16.mxu0 0
  %1275 = vmatpush1.bf16.msra.mxu0 %v1258
  %1276 = vmatprep.subr.bf16.mxu0 0
  %1277 = vmatpush1.bf16.msra.mxu0 %v1259
  %1278 = vmatprep.subr.bf16.mxu0 0
  %1279 = vmatpush1.bf16.msra.mxu0 %v1260
  %1280 = vmatprep.subr.bf16.mxu0 0
  %1281 = vmatpush1.bf16.msra.mxu0 %v1261
  %1282 = vmatprep.subr.bf16.mxu0 0
  %1283 = vmatpush1.bf16.msra.mxu0 %v1262
  %1284 = vmatprep.subr.bf16.mxu0 0
  %1285 = vmatpush1.bf16.msra.mxu0 %v1263
  %1286 = vmatprep.subr.bf16.mxu0 0
  %1287 = vmatpush1.bf16.msra.mxu0 %v1264
  %1288 = vmatprep.subr.bf16.mxu0 0
  %1289 = vmatpush1.bf16.msra.mxu0 %v1265
  %1290 = vmatprep.subr.bf16.mxu0 0
  %1291 = vmatpush1.bf16.msra.mxu0 0
  %1292 = vmatprep.subr.bf16.mxu0 0
  %1293 = vmatpush1.bf16.msra.mxu0 0
  %1294 = vmatprep.subr.bf16.mxu0 0
  %1295 = vmatpush1.bf16.msra.mxu0 0
  %1296 = vmatprep.subr.bf16.mxu0 0
  %1297 = vmatpush1.bf16.msra.mxu0 0
  %1298 = vmatprep.subr.bf16.mxu0 0
  %1299 = vmatpush1.bf16.msra.mxu0 0
  %1300 = vmatprep.subr.bf16.mxu0 0
  %1301 = vmatpush1.bf16.msra.mxu0 0
  %1302 = vmatprep.subr.bf16.mxu0 0
  %1303 = vmatpush1.bf16.msra.mxu0 0
  %1304 = vmatprep.subr.bf16.mxu0 0
  %1305 = vmatpush1.bf16.msra.mxu0 0
  %1306 = vmatprep.mubr.bf16.mxu0 0
  %1307 = vmatmul.mubr.bf16.gmra.mrb[0].mxu0 %v1208
  %v1308 = vpop.f32.mrb[0].mxu0
  %v1309 = vadd.f32 0.0, %v1308
  %v1310 = vpop.f32.mrb[0].mxu0
  %v1311 = vpop.f32.mrb[0].mxu0
  %v1312 = vadd.f32 0.0, %v1311
  %v1313 = vpop.f32.mrb[0].mxu0
  %1314 = vdwg.mxu0
  %v1315 = vadd.f32 %v1200, %v1309
  %v1316 = vadd.f32 %v1203, %v1312
  %v1317 = vld [vmem:[#allocation3 + $0x3] sm:$0xff]
  %v1318 = vld [vmem:[#allocation3 + $0xb] sm:$0xff]
  %v1319 = vpack.c.bf16 %v1318, %v1317
  %s1320 = scalar_lea.vmem %s3, 192
  %v1321 = vld [vmem:[%s1320] sm:$0xf]
  %v1322 = vld [vmem:[%s1320 + $0x4] sm:$0xf]
  %v1323 = vld [vmem:[%s1320 + $0x8] sm:$0xf]
  %v1324 = vld [vmem:[%s1320 + $0xc] sm:$0xf]
  %v1325 = vld [vmem:[%s1320 + $0x10] sm:$0xf]
  %v1326 = vld [vmem:[%s1320 + $0x14] sm:$0xf]
  %v1327 = vld [vmem:[%s1320 + $0x18] sm:$0xf]
  %v1328 = vld [vmem:[%s1320 + $0x1c] sm:$0xf]
  %v1329 = vld [vmem:[%s1320 + $0x20] sm:$0xf]
  %v1330 = vld [vmem:[%s1320 + $0x24] sm:$0xf]
  %v1331 = vld [vmem:[%s1320 + $0x28] sm:$0xf]
  %v1332 = vld [vmem:[%s1320 + $0x2c] sm:$0xf]
  %v1333 = vld [vmem:[%s1320 + $0x30] sm:$0xf]
  %v1334 = vld [vmem:[%s1320 + $0x34] sm:$0xf]
  %v1335 = vld [vmem:[%s1320 + $0x38] sm:$0xf]
  %v1336 = vld [vmem:[%s1320 + $0x3c] sm:$0xf]
  %v1353 = vunpack.c.l.b16 %v1321
  %v1354 = vunpack.c.l.b16 %v1322
  %v1355 = vunpack.c.l.b16 %v1323
  %v1356 = vunpack.c.l.b16 %v1324
  %v1357 = vunpack.c.l.b16 %v1325
  %v1358 = vunpack.c.l.b16 %v1326
  %v1359 = vunpack.c.l.b16 %v1327
  %v1360 = vunpack.c.l.b16 %v1328
  %v1361 = vunpack.c.l.b16 %v1329
  %v1362 = vunpack.c.l.b16 %v1330
  %v1363 = vunpack.c.l.b16 %v1331
  %v1364 = vunpack.c.l.b16 %v1332
  %v1365 = vunpack.c.l.b16 %v1333
  %v1366 = vunpack.c.l.b16 %v1334
  %v1367 = vunpack.c.l.b16 %v1335
  %v1368 = vunpack.c.l.b16 %v1336
  %v1369 = vpack.c.b16 %v1354, %v1353
  %v1370 = vpack.c.b16 %v1356, %v1355
  %v1371 = vpack.c.b16 %v1358, %v1357
  %v1372 = vpack.c.b16 %v1360, %v1359
  %v1373 = vpack.c.b16 %v1362, %v1361
  %v1374 = vpack.c.b16 %v1364, %v1363
  %v1375 = vpack.c.b16 %v1366, %v1365
  %v1376 = vpack.c.b16 %v1368, %v1367
  %1385 = vmatprep.subr.bf16.mxu0 0
  %1386 = vmatpush1.bf16.msra.mxu0 %v1369
  %1387 = vmatprep.subr.bf16.mxu0 0
  %1388 = vmatpush1.bf16.msra.mxu0 %v1370
  %1389 = vmatprep.subr.bf16.mxu0 0
  %1390 = vmatpush1.bf16.msra.mxu0 %v1371
  %1391 = vmatprep.subr.bf16.mxu0 0
  %1392 = vmatpush1.bf16.msra.mxu0 %v1372
  %1393 = vmatprep.subr.bf16.mxu0 0
  %1394 = vmatpush1.bf16.msra.mxu0 %v1373
  %1395 = vmatprep.subr.bf16.mxu0 0
  %1396 = vmatpush1.bf16.msra.mxu0 %v1374
  %1397 = vmatprep.subr.bf16.mxu0 0
  %1398 = vmatpush1.bf16.msra.mxu0 %v1375
  %1399 = vmatprep.subr.bf16.mxu0 0
  %1400 = vmatpush1.bf16.msra.mxu0 %v1376
  %1401 = vmatprep.subr.bf16.mxu0 0
  %1402 = vmatpush1.bf16.msra.mxu0 0
  %1403 = vmatprep.subr.bf16.mxu0 0
  %1404 = vmatpush1.bf16.msra.mxu0 0
  %1405 = vmatprep.subr.bf16.mxu0 0
  %1406 = vmatpush1.bf16.msra.mxu0 0
  %1407 = vmatprep.subr.bf16.mxu0 0
  %1408 = vmatpush1.bf16.msra.mxu0 0
  %1409 = vmatprep.subr.bf16.mxu0 0
  %1410 = vmatpush1.bf16.msra.mxu0 0
  %1411 = vmatprep.subr.bf16.mxu0 0
  %1412 = vmatpush1.bf16.msra.mxu0 0
  %1413 = vmatprep.subr.bf16.mxu0 0
  %1414 = vmatpush1.bf16.msra.mxu0 0
  %1415 = vmatprep.subr.bf16.mxu0 0
  %1416 = vmatpush1.bf16.msra.mxu0 0
  %1417 = vmatprep.mubr.bf16.mxu0 0
  %1418 = vmatmul.mubr.bf16.gmra.mrb[0].mxu0 %v1319
  %v1419 = vpop.f32.mrb[0].mxu0
  %v1420 = vadd.f32 0.0, %v1419
  %v1421 = vpop.f32.mrb[0].mxu0
  %v1422 = vpop.f32.mrb[0].mxu0
  %v1423 = vadd.f32 0.0, %v1422
  %v1424 = vpop.f32.mrb[0].mxu0
  %1425 = vdwg.mxu0
  %v1426 = vadd.f32 %v1315, %v1420
  %v1427 = vadd.f32 %v1316, %v1423
  %v1428 = vld [vmem:[#allocation3 + $0x4] sm:$0xff]
  %v1429 = vld [vmem:[#allocation3 + $0xc] sm:$0xff]
  %v1430 = vpack.c.bf16 %v1429, %v1428
  %s1431 = scalar_lea.vmem %s3, 256
  %v1432 = vld [vmem:[%s1431] sm:$0xf]
  %v1433 = vld [vmem:[%s1431 + $0x4] sm:$0xf]
  %v1434 = vld [vmem:[%s1431 + $0x8] sm:$0xf]
  %v1435 = vld [vmem:[%s1431 + $0xc] sm:$0xf]
  %v1436 = vld [vmem:[%s1431 + $0x10] sm:$0xf]
  %v1437 = vld [vmem:[%s1431 + $0x14] sm:$0xf]
  %v1438 = vld [vmem:[%s1431 + $0x18] sm:$0xf]
  %v1439 = vld [vmem:[%s1431 + $0x1c] sm:$0xf]
  %v1440 = vld [vmem:[%s1431 + $0x20] sm:$0xf]
  %v1441 = vld [vmem:[%s1431 + $0x24] sm:$0xf]
  %v1442 = vld [vmem:[%s1431 + $0x28] sm:$0xf]
  %v1443 = vld [vmem:[%s1431 + $0x2c] sm:$0xf]
  %v1444 = vld [vmem:[%s1431 + $0x30] sm:$0xf]
  %v1445 = vld [vmem:[%s1431 + $0x34] sm:$0xf]
  %v1446 = vld [vmem:[%s1431 + $0x38] sm:$0xf]
  %v1447 = vld [vmem:[%s1431 + $0x3c] sm:$0xf]
  %v1464 = vunpack.c.l.b16 %v1432
  %v1465 = vunpack.c.l.b16 %v1433
  %v1466 = vunpack.c.l.b16 %v1434
  %v1467 = vunpack.c.l.b16 %v1435
  %v1468 = vunpack.c.l.b16 %v1436
  %v1469 = vunpack.c.l.b16 %v1437
  %v1470 = vunpack.c.l.b16 %v1438
  %v1471 = vunpack.c.l.b16 %v1439
  %v1472 = vunpack.c.l.b16 %v1440
  %v1473 = vunpack.c.l.b16 %v1441
  %v1474 = vunpack.c.l.b16 %v1442
  %v1475 = vunpack.c.l.b16 %v1443
  %v1476 = vunpack.c.l.b16 %v1444
  %v1477 = vunpack.c.l.b16 %v1445
  %v1478 = vunpack.c.l.b16 %v1446
  %v1479 = vunpack.c.l.b16 %v1447
  %v1480 = vpack.c.b16 %v1465, %v1464
  %v1481 = vpack.c.b16 %v1467, %v1466
  %v1482 = vpack.c.b16 %v1469, %v1468
  %v1483 = vpack.c.b16 %v1471, %v1470
  %v1484 = vpack.c.b16 %v1473, %v1472
  %v1485 = vpack.c.b16 %v1475, %v1474
  %v1486 = vpack.c.b16 %v1477, %v1476
  %v1487 = vpack.c.b16 %v1479, %v1478
  %1496 = vmatprep.subr.bf16.mxu0 0
  %1497 = vmatpush1.bf16.msra.mxu0 %v1480
  %1498 = vmatprep.subr.bf16.mxu0 0
  %1499 = vmatpush1.bf16.msra.mxu0 %v1481
  %1500 = vmatprep.subr.bf16.mxu0 0
  %1501 = vmatpush1.bf16.msra.mxu0 %v1482
  %1502 = vmatprep.subr.bf16.mxu0 0
  %1503 = vmatpush1.bf16.msra.mxu0 %v1483
  %1504 = vmatprep.subr.bf16.mxu0 0
  %1505 = vmatpush1.bf16.msra.mxu0 %v1484
  %1506 = vmatprep.subr.bf16.mxu0 0
  %1507 = vmatpush1.bf16.msra.mxu0 %v1485
  %1508 = vmatprep.subr.bf16.mxu0 0
  %1509 = vmatpush1.bf16.msra.mxu0 %v1486
  %1510 = vmatprep.subr.bf16.mxu0 0
  %1511 = vmatpush1.bf16.msra.mxu0 %v1487
  %1512 = vmatprep.subr.bf16.mxu0 0
  %1513 = vmatpush1.bf16.msra.mxu0 0
  %1514 = vmatprep.subr.bf16.mxu0 0
  %1515 = vmatpush1.bf16.msra.mxu0 0
  %1516 = vmatprep.subr.bf16.mxu0 0
  %1517 = vmatpush1.bf16.msra.mxu0 0
  %1518 = vmatprep.subr.bf16.mxu0 0
  %1519 = vmatpush1.bf16.msra.mxu0 0
  %1520 = vmatprep.subr.bf16.mxu0 0
  %1521 = vmatpush1.bf16.msra.mxu0 0
  %1522 = vmatprep.subr.bf16.mxu0 0
  %1523 = vmatpush1.bf16.msra.mxu0 0
  %1524 = vmatprep.subr.bf16.mxu0 0
  %1525 = vmatpush1.bf16.msra.mxu0 0
  %1526 = vmatprep.subr.bf16.mxu0 0
  %1527 = vmatpush1.bf16.msra.mxu0 0
  %1528 = vmatprep.mubr.bf16.mxu0 0
  %1529 = vmatmul.mubr.bf16.gmra.mrb[0].mxu0 %v1430
  %v1530 = vpop.f32.mrb[0].mxu0
  %v1531 = vadd.f32 0.0, %v1530
  %v1532 = vpop.f32.mrb[0].mxu0
  %v1533 = vpop.f32.mrb[0].mxu0
  %v1534 = vadd.f32 0.0, %v1533
  %v1535 = vpop.f32.mrb[0].mxu0
  %1536 = vdwg.mxu0
  %v1537 = vadd.f32 %v1426, %v1531
  %v1538 = vadd.f32 %v1427, %v1534
  %v1539 = vld [vmem:[%s4] sm:$0x1]
  %v1541 = vlaneseq
  %v1542 = vshrl.u32 %v1541, 7
  %v1543 = vsub.s32 0, %v1542
  %v1544 = vrot.slane %v1539, %v1543
  %v1546 = vadd.f32 %v1537, %v1544
  %v1547 = vadd.f32 %v1538, %v1544
  %v1548 = vmax.f32 %v1546, 0.0
  %v1549 = vmax.f32 %v1547, 0.0
  %1550 = vst [vmem:[#allocation4] sm:$0xff] %v1548
  %1551 = vst [vmem:[#allocation4 + $0x8] sm:$0xff] %v1549
  %v1552 = vld [vmem:[#allocation4] ss:$2 sm:$0xff]
  %s1553 = scalar_lea.vmem [#allocation4], 1
  %v1554 = vld [vmem:[%s1553] ss:$2 sm:$0xff]
  %v1555 = vmax.f32 %v1552, %v1554
  %1556 = vrot.lane.b32.xlu0 %v1555, 96
  %v1557 = vpop.permute.xlu0 %1556
  %v1558 = vmax.f32 %v1555, %v1557
  %1559 = vst [vmem:[%s5] sm:$0xff] %v1558
  // Predicated region
  $region22: #{subnet_conv_forward.1} parent=0 // pred_check
    _
  $region23: #{subnet_conv_forward.1} parent=0 // pred_check_branch
    %1561 = sbr.rel (0) target = $region25
  $region24: #{subnet_conv_forward.1} parent=0 // pred_region
    _
  $region25: #{subnet_conv_forward.1} parent=0 // pred_fallthru
    _
  // Predicated region
  $region26: #{subnet_conv_forward.1} parent=0 // pred_check
    _
  $region27: #{subnet_conv_forward.1} parent=0 // pred_check_branch
    %1563 = sbr.rel (0) target = $region29
  $region28: #{subnet_conv_forward.1} parent=0 // pred_region
    _
  $region29: #{subnet_conv_forward.1} parent=0 // pred_fallthru
    _

</llo_original>
